<compile_context>
chip_gen: v7x
topology: tpu7x:2x2x1
jax: 0.10.0
libtpu: 0.0.40
codegen_flags: <defaults>
</compile_context>

<pallas_src>
import math

import jax
import jax.numpy as jnp
from jax.experimental import pallas as pl
from jax.experimental.pallas import tpu as pltpu

KSIZE = 7          # conv taps
PAD = 3            # (KSIZE - 1) // 2 zero padding on each side
HALO = 8           # sublane-aligned halo block fetched from each neighbour tile


# ----------------------------- Pallas kernel ---------------------------------
def _dwconv_silu_kernel(x_ref, prev_ref, next_ref, w_ref, b_ref, o_ref, slab_ref):
    # x_ref    : (TN, TC)      current point tile (points on sublanes, channels on lanes)
    # prev_ref : (HALO, TC)    last 8 rows of the previous tile (clamped at the start)
    # next_ref : (HALO, TC)    first 8 rows of the next tile (clamped at the end)
    # w_ref    : (7, TC)       per-channel depthwise taps (f32)
    # b_ref    : (1, TC)       per-channel bias (f32)
    # o_ref    : (TN, TC)
    # slab_ref : (TN + 16, TC) f32 scratch laid out as [prev(8) | x(TN) | next(8)]
    tn = x_ref.shape[0]
    i = pl.program_id(2)
    f32 = jnp.float32

    # The module zero-pads the sequence: kill the halo contribution at the ends.
    prev_scale = jnp.where(i == 0, 0.0, 1.0)
    next_scale = jnp.where(i == pl.num_programs(2) - 1, 0.0, 1.0)

    # Assemble the padded slab with three sublane-aligned stores.
    slab_ref[0:HALO, :] = prev_ref[...].astype(f32) * prev_scale
    slab_ref[HALO:HALO + tn, :] = x_ref[...].astype(f32)
    slab_ref[HALO + tn:HALO + tn + HALO, :] = next_ref[...].astype(f32) * next_scale

    # Seven shifted full-slab FMAs on the VPU.  slab[HALO + r] == x[r], so tap k
    # (input offset k - PAD) reads slab rows [HALO - PAD + k, HALO - PAD + k + tn).
    w = w_ref[...]
    base = HALO - PAD
    acc = slab_ref[base:base + tn, :] * w[0:1, :]
    for k in range(1, KSIZE):                           # static unroll over 7 taps
        acc = acc + slab_ref[base + k:base + k + tn, :] * w[k:k + 1, :]
    acc = acc + b_ref[...]                              # broadcast (1, TC) -> (TN, TC)

    # SiLU: exp and approx reciprocal both ride the EUP slot (no VALU divide).
    sig = pl.reciprocal(1.0 + jnp.exp(-acc), approx=True)
    o_ref[...] = (acc * sig).astype(o_ref.dtype)


# ------------------------------- tiling helpers -------------------------------
def _pick_channel_tile(c):
    # Lane-dense tiles when C is a multiple of 128; otherwise take the whole C
    # (block dim equal to the full array dim is always legal).
    if c % 128 == 0:
        for tc in (512, 256, 128):
            if c % tc == 0:
                return tc
    return c


def _pick_point_tile(n, tc):
    """Largest multiple-of-8 divisor of N whose (TN, tc) f32 slab is <= ~1 MiB."""
    budget_rows = max(8, (1 << 20) // (tc * 4))
    if n <= budget_rows or n % 8 != 0:
        return n            # monolithic fallback (full-dim block is always legal)
    tn = 8
    for cand in range(8, budget_rows + 1, 8):
        if n % cand == 0:
            tn = cand
    return tn


# ------------------------------- wrapper --------------------------------------
def point_lite_conv(xyz, feature, weight, bias, *, point_tile=None, channel_tile=None):
    """PointLiteConv.forward: depthwise Conv1d(k=7, pad=3, groups=C, bias=True) + SiLU.

    xyz:     (B, N, 3)   -- unused by the math (kept for signature parity)
    feature: (B, N, C)
    weight:  (C, 1, 7)   -- PyTorch Conv1d weight layout for groups == C
    bias:    (C,)
    returns: (B, N, C), same dtype as `feature`.
    """
    del xyz
    B, N, C = feature.shape
    assert weight.shape == (C, 1, KSIZE), weight.shape
    assert N >= HALO, "TODO(synk): support tiny point counts (N < 8)"

    tc = channel_tile if channel_tile is not None else _pick_channel_tile(C)
    assert C % tc == 0, (C, tc)
    tn = point_tile if point_tile is not None else _pick_point_tile(N, tc)
    assert N % tn == 0 and (tn % 8 == 0 or tn == N), (N, tn)
    n_tiles = N // tn
    tn8 = tn // 8                       # halo index stride, in 8-row block units
    last_halo_blk = N // 8 - 1          # clamp target for the trailing halo block

    w_rows = jnp.transpose(weight.reshape(C, KSIZE).astype(jnp.float32), (1, 0))  # (7, C)
    b_row = bias.astype(jnp.float32).reshape(1, C)                                # (1, C)

    def main_map(b, c, i):
        return (b, i, c)

    def prev_map(b, c, i):              # last 8 rows of the previous tile (clamped at i == 0)
        return (b, jnp.maximum(i * tn8 - 1, 0), c)

    def next_map(b, c, i):              # first 8 rows of the next tile (clamped at the end)
        return (b, jnp.minimum((i + 1) * tn8, last_halo_blk), c)

    itemsize = feature.dtype.itemsize
    cost = pl.CostEstimate(
        flops=17 * B * N * C,
        transcendentals=B * N * C,
        bytes_accessed=2 * B * N * C * itemsize + (KSIZE + 1) * C * 4,
    )

    return pl.pallas_call(
        _dwconv_silu_kernel,
        out_shape=jax.ShapeDtypeStruct((B, N, C), feature.dtype),
        grid=(B, C // tc, n_tiles),
        in_specs=[
            pl.BlockSpec((None, tn, tc), main_map),       # current tile
            pl.BlockSpec((None, HALO, tc), prev_map),     # 8-row leading halo
            pl.BlockSpec((None, HALO, tc), next_map),     # 8-row trailing halo
            pl.BlockSpec((KSIZE, tc), lambda b, c, i: (0, c)),
            pl.BlockSpec((1, tc), lambda b, c, i: (0, c)),
        ],
        out_specs=pl.BlockSpec((None, tn, tc), main_map),
        scratch_shapes=[pltpu.VMEM((tn + 2 * HALO, tc), jnp.float32)],
        compiler_params=pltpu.CompilerParams(
            dimension_semantics=("parallel", "parallel", "parallel")),
        cost_estimate=cost,
    )(feature, feature, feature, w_rows, b_row)


# ---------------------- pure-JAX reference (torch transcription) --------------
def ref_point_lite_conv(feature, weight, bias):
    # feature (B, N, C); weight (C, 1, 7) [PyTorch OIW grouped layout]; bias (C,)
    x = jnp.transpose(feature, (0, 2, 1)).astype(jnp.float32)            # (B, C, N)
    out = jax.lax.conv_general_dilated(
        x, weight.astype(jnp.float32),
        window_strides=(1,),
        padding=((PAD, PAD),),
        dimension_numbers=("NCH", "OIH", "NCH"),
        feature_group_count=weight.shape[0],
    )
    out = out + bias[None, :, None]
    out = out * jax.nn.sigmoid(out)                                      # SiLU
    return jnp.transpose(out, (0, 2, 1)).astype(feature.dtype)           # (B, N, C)


if __name__ == "__main__":
    B, N, C = 2, 256, 32
    key = jax.random.PRNGKey(0)
    k1, k2, k3, k4 = jax.random.split(key, 4)
    xyz = jax.random.normal(k1, (B, N, 3), jnp.float32)
    feature = jax.random.normal(k2, (B, N, C), jnp.float32)

    # PyTorch default Conv1d init: U(-sqrt(k), sqrt(k)) with k = 1/(in_per_group*ksize)
    bound = 1.0 / math.sqrt(KSIZE)
    weight = jax.random.uniform(k3, (C, 1, KSIZE), jnp.float32, -bound, bound)
    bias = jax.random.uniform(k4, (C,), jnp.float32, -bound, bound)

    ref = ref_point_lite_conv(feature, weight, bias)

    # Default tiling (monolithic N for this tiny shape).
    out = jax.block_until_ready(point_lite_conv(xyz, feature, weight, bias))
    assert out.shape == (B, N, C), out.shape
    err = float(jnp.max(jnp.abs(out - ref)))
    # rtol absorbs the EUP approx-reciprocal in SiLU (relative-error bounded).
    assert jnp.allclose(out, ref, atol=1e-4, rtol=5e-3), err

    # Forced N tiling (4 tiles of 64 points) to exercise the halo path on-device.
    out_t = jax.block_until_ready(
        point_lite_conv(xyz, feature, weight, bias, point_tile=64))
    err_t = float(jnp.max(jnp.abs(out_t - ref)))
    assert jnp.allclose(out_t, ref, atol=1e-4, rtol=5e-3), err_t

    print("KERNEL_OK")
</pallas_src>

<mosaic_0001>
module attributes {stable_mosaic.version = 11 : i64} {
  func.func @_dwconv_silu_kernel(%arg0: i32, %arg1: i32, %arg2: i32, %arg3: memref<1x256x32xf32, #tpu.memory_space<vmem>>, %arg4: memref<1x8x32xf32, #tpu.memory_space<vmem>>, %arg5: memref<1x8x32xf32, #tpu.memory_space<vmem>>, %arg6: memref<7x32xf32, #tpu.memory_space<vmem>>, %arg7: memref<1x32xf32, #tpu.memory_space<vmem>>, %arg8: memref<1x256x32xf32, #tpu.memory_space<vmem>>, %arg9: memref<272x32xf32, #tpu.memory_space<vmem>>) attributes {dimension_semantics = [#tpu.dimension_semantics<parallel>, #tpu.dimension_semantics<parallel>, #tpu.dimension_semantics<parallel>], iteration_bounds = array<i64: 2, 1, 1>, scalar_prefetch = 0 : i64, scratch_operands = 1 : i64, tpu.core_type = #tpu.core_type<tc>, window_params = [{transform_indices = @transform_0, window_bounds = array<i64: 1, 256, 32>}, {transform_indices = @transform_1, window_bounds = array<i64: 1, 8, 32>}, {transform_indices = @transform_2, window_bounds = array<i64: 1, 8, 32>}, {transform_indices = @transform_3, window_bounds = array<i64: 7, 32>}, {transform_indices = @transform_4, window_bounds = array<i64: 1, 32>}, {transform_indices = @transform_5, window_bounds = array<i64: 1, 256, 32>}]} {
    %c0_i32 = arith.constant 0 : i32
    %0 = arith.cmpi eq, %arg2, %c0_i32 : i32
    %cst = arith.constant 0.000000e+00 : f32
    %cst_0 = arith.constant 1.000000e+00 : f32
    %1 = arith.select %0, %cst, %cst_0 : f32
    %c0_i32_1 = arith.constant 0 : i32
    %2 = arith.cmpi eq, %arg2, %c0_i32_1 : i32
    %cst_2 = arith.constant 0.000000e+00 : f32
    %cst_3 = arith.constant 1.000000e+00 : f32
    %3 = arith.select %2, %cst_2, %cst_3 : f32
    %c0 = arith.constant 0 : index
    %c0_4 = arith.constant 0 : index
    %c0_5 = arith.constant 0 : index
    %4 = vector.load %arg4[%c0, %c0_4, %c0_5] : memref<1x8x32xf32, #tpu.memory_space<vmem>>, vector<1x8x32xf32>
    %5 = vector.shape_cast %4 : vector<1x8x32xf32> to vector<8x32xf32>
    %6 = vector.broadcast %1 : f32 to vector<8x32xf32>
    %7 = arith.mulf %5, %6 : vector<8x32xf32>
    %c0_6 = arith.constant 0 : index
    %c0_7 = arith.constant 0 : index
    %8 = vector.load %arg9[%c0_6, %c0_7] : memref<272x32xf32, #tpu.memory_space<vmem>>, vector<8x32xf32>
    tpu.vector_store %arg9[%c0_6, %c0_7], %7 {strides = array<i32>} : memref<272x32xf32, #tpu.memory_space<vmem>>, vector<8x32xf32>,
    %c0_8 = arith.constant 0 : index
    %c0_9 = arith.constant 0 : index
    %c0_10 = arith.constant 0 : index
    %9 = vector.load %arg3[%c0_8, %c0_9, %c0_10] : memref<1x256x32xf32, #tpu.memory_space<vmem>>, vector<1x256x32xf32>
    %10 = vector.shape_cast %9 : vector<1x256x32xf32> to vector<256x32xf32>
    %c8 = arith.constant 8 : index
    %c0_11 = arith.constant 0 : index
    %11 = vector.load %arg9[%c8, %c0_11] : memref<272x32xf32, #tpu.memory_space<vmem>>, vector<256x32xf32>
    tpu.vector_store %arg9[%c8, %c0_11], %10 {strides = array<i32>} : memref<272x32xf32, #tpu.memory_space<vmem>>, vector<256x32xf32>,
    %c0_12 = arith.constant 0 : index
    %c0_13 = arith.constant 0 : index
    %c0_14 = arith.constant 0 : index
    %12 = vector.load %arg5[%c0_12, %c0_13, %c0_14] : memref<1x8x32xf32, #tpu.memory_space<vmem>>, vector<1x8x32xf32>
    %13 = vector.shape_cast %12 : vector<1x8x32xf32> to vector<8x32xf32>
    %14 = vector.broadcast %3 : f32 to vector<8x32xf32>
    %15 = arith.mulf %13, %14 : vector<8x32xf32>
    %c264 = arith.constant 264 : index
    %c0_15 = arith.constant 0 : index
    %16 = vector.load %arg9[%c264, %c0_15] : memref<272x32xf32, #tpu.memory_space<vmem>>, vector<8x32xf32>
    tpu.vector_store %arg9[%c264, %c0_15], %15 {strides = array<i32>} : memref<272x32xf32, #tpu.memory_space<vmem>>, vector<8x32xf32>,
    %c0_16 = arith.constant 0 : index
    %c0_17 = arith.constant 0 : index
    %17 = vector.load %arg6[%c0_16, %c0_17] : memref<7x32xf32, #tpu.memory_space<vmem>>, vector<7x32xf32>
    %c5 = arith.constant 5 : index
    %c0_18 = arith.constant 0 : index
    %18 = vector.load %arg9[%c5, %c0_18] : memref<272x32xf32, #tpu.memory_space<vmem>>, vector<256x32xf32>
    %19 = vector.extract_strided_slice %17 {offsets = [0, 0], sizes = [1, 32], strides = [1, 1]} : vector<7x32xf32> to vector<1x32xf32>
    %20 = vector.broadcast %19 : vector<1x32xf32> to vector<256x32xf32>
    %21 = arith.mulf %18, %20 : vector<256x32xf32>
    %c6 = arith.constant 6 : index
    %c0_19 = arith.constant 0 : index
    %22 = vector.load %arg9[%c6, %c0_19] : memref<272x32xf32, #tpu.memory_space<vmem>>, vector<256x32xf32>
    %23 = vector.extract_strided_slice %17 {offsets = [1, 0], sizes = [1, 32], strides = [1, 1]} : vector<7x32xf32> to vector<1x32xf32>
    %24 = vector.broadcast %23 : vector<1x32xf32> to vector<256x32xf32>
    %25 = arith.mulf %22, %24 : vector<256x32xf32>
    %26 = arith.addf %21, %25 : vector<256x32xf32>
    %c7 = arith.constant 7 : index
    %c0_20 = arith.constant 0 : index
    %27 = vector.load %arg9[%c7, %c0_20] : memref<272x32xf32, #tpu.memory_space<vmem>>, vector<256x32xf32>
    %28 = vector.extract_strided_slice %17 {offsets = [2, 0], sizes = [1, 32], strides = [1, 1]} : vector<7x32xf32> to vector<1x32xf32>
    %29 = vector.broadcast %28 : vector<1x32xf32> to vector<256x32xf32>
    %30 = arith.mulf %27, %29 : vector<256x32xf32>
    %31 = arith.addf %26, %30 : vector<256x32xf32>
    %c8_21 = arith.constant 8 : index
    %c0_22 = arith.constant 0 : index
    %32 = vector.load %arg9[%c8_21, %c0_22] : memref<272x32xf32, #tpu.memory_space<vmem>>, vector<256x32xf32>
    %33 = vector.extract_strided_slice %17 {offsets = [3, 0], sizes = [1, 32], strides = [1, 1]} : vector<7x32xf32> to vector<1x32xf32>
    %34 = vector.broadcast %33 : vector<1x32xf32> to vector<256x32xf32>
    %35 = arith.mulf %32, %34 : vector<256x32xf32>
    %36 = arith.addf %31, %35 : vector<256x32xf32>
    %c9 = arith.constant 9 : index
    %c0_23 = arith.constant 0 : index
    %37 = vector.load %arg9[%c9, %c0_23] : memref<272x32xf32, #tpu.memory_space<vmem>>, vector<256x32xf32>
    %38 = vector.extract_strided_slice %17 {offsets = [4, 0], sizes = [1, 32], strides = [1, 1]} : vector<7x32xf32> to vector<1x32xf32>
    %39 = vector.broadcast %38 : vector<1x32xf32> to vector<256x32xf32>
    %40 = arith.mulf %37, %39 : vector<256x32xf32>
    %41 = arith.addf %36, %40 : vector<256x32xf32>
    %c10 = arith.constant 10 : index
    %c0_24 = arith.constant 0 : index
    %42 = vector.load %arg9[%c10, %c0_24] : memref<272x32xf32, #tpu.memory_space<vmem>>, vector<256x32xf32>
    %43 = vector.extract_strided_slice %17 {offsets = [5, 0], sizes = [1, 32], strides = [1, 1]} : vector<7x32xf32> to vector<1x32xf32>
    %44 = vector.broadcast %43 : vector<1x32xf32> to vector<256x32xf32>
    %45 = arith.mulf %42, %44 : vector<256x32xf32>
    %46 = arith.addf %41, %45 : vector<256x32xf32>
    %c11 = arith.constant 11 : index
    %c0_25 = arith.constant 0 : index
    %47 = vector.load %arg9[%c11, %c0_25] : memref<272x32xf32, #tpu.memory_space<vmem>>, vector<256x32xf32>
    %48 = vector.extract_strided_slice %17 {offsets = [6, 0], sizes = [1, 32], strides = [1, 1]} : vector<7x32xf32> to vector<1x32xf32>
    %49 = vector.broadcast %48 : vector<1x32xf32> to vector<256x32xf32>
    %50 = arith.mulf %47, %49 : vector<256x32xf32>
    %51 = arith.addf %46, %50 : vector<256x32xf32>
    %c0_26 = arith.constant 0 : index
    %c0_27 = arith.constant 0 : index
    %52 = vector.load %arg7[%c0_26, %c0_27] : memref<1x32xf32, #tpu.memory_space<vmem>>, vector<1x32xf32>
    %53 = vector.broadcast %52 : vector<1x32xf32> to vector<256x32xf32>
    %54 = arith.addf %51, %53 : vector<256x32xf32>
    %cst_28 = arith.constant 0.000000e+00 : f32
    %55 = vector.broadcast %cst_28 : f32 to vector<256x32xf32>
    %56 = arith.subf %55, %54 : vector<256x32xf32>
    %57 = math.exp %56 : vector<256x32xf32>
    %cst_29 = arith.constant 1.000000e+00 : f32
    %58 = vector.broadcast %cst_29 : f32 to vector<256x32xf32>
    %59 = arith.addf %58, %57 : vector<256x32xf32>
    %60 = tpu.reciprocal %59 {approx = true} : vector<256x32xf32> -> vector<256x32xf32>
    %61 = arith.mulf %54, %60 : vector<256x32xf32>
    %c0_30 = arith.constant 0 : index
    %c0_31 = arith.constant 0 : index
    %c0_32 = arith.constant 0 : index
    %62 = vector.load %arg8[%c0_30, %c0_31, %c0_32] : memref<1x256x32xf32, #tpu.memory_space<vmem>>, vector<1x256x32xf32>
    %63 = vector.shape_cast %62 : vector<1x256x32xf32> to vector<256x32xf32>
    %64 = vector.shape_cast %61 : vector<256x32xf32> to vector<1x256x32xf32>
    tpu.vector_store %arg8[%c0_30, %c0_31, %c0_32], %64 {strides = array<i32>} : memref<1x256x32xf32, #tpu.memory_space<vmem>>, vector<1x256x32xf32>,
    return
  }
  func.func @transform_0(%arg0: i32, %arg1: i32, %arg2: i32) -> (i32, i32, i32) {
    %c0_i32 = arith.constant 0 : i32
    return %arg0, %arg2, %arg1 : i32, i32, i32
  }
  func.func @transform_1(%arg0: i32, %arg1: i32, %arg2: i32) -> (i32, i32, i32) {
    %c32_i32 = arith.constant 32 : i32
    %0 = arith.muli %arg2, %c32_i32 : i32
    %c1_i32 = arith.constant 1 : i32
    %1 = arith.subi %0, %c1_i32 : i32
    %c0_i32 = arith.constant 0 : i32
    %2 = arith.maxsi %1, %c0_i32 : i32
    %c0_i32_0 = arith.constant 0 : i32
    return %arg0, %2, %arg1 : i32, i32, i32
  }
  func.func @transform_2(%arg0: i32, %arg1: i32, %arg2: i32) -> (i32, i32, i32) {
    %c1_i32 = arith.constant 1 : i32
    %0 = arith.addi %arg2, %c1_i32 : i32
    %c32_i32 = arith.constant 32 : i32
    %1 = arith.muli %0, %c32_i32 : i32
    %c31_i32 = arith.constant 31 : i32
    %2 = arith.minsi %1, %c31_i32 : i32
    %c0_i32 = arith.constant 0 : i32
    return %arg0, %2, %arg1 : i32, i32, i32
  }
  func.func @transform_3(%arg0: i32, %arg1: i32, %arg2: i32) -> (i32, i32) {
    %c0_i32 = arith.constant 0 : i32
    %c0_i32_0 = arith.constant 0 : i32
    return %c0_i32, %arg1 : i32, i32
  }
  func.func @transform_4(%arg0: i32, %arg1: i32, %arg2: i32) -> (i32, i32) {
    %c0_i32 = arith.constant 0 : i32
    %c0_i32_0 = arith.constant 0 : i32
    return %c0_i32, %arg1 : i32, i32
  }
  func.func @transform_5(%arg0: i32, %arg1: i32, %arg2: i32) -> (i32, i32, i32) {
    %c0_i32 = arith.constant 0 : i32
    return %arg0, %arg2, %arg1 : i32, i32, i32
  }
}

</mosaic_0001>

<llo_original>
// kernel: tpu_custom_call.1
$region0: #{tpu_custom_call.1}
  #allocation0 [shape = 'u32[]', space=smem, size = 0x4, offset = 0x4, fixed_abs, tag = 'smem constant byte address 0x4 - core index']
  #allocation1 [shape = 'u32[144,128]{1,0:T(1,128)}', space=vmem, size = 0x12000, scoped, tag = 'internal scratch']
  #allocation2 [shape = 'f32[272,32]{1,0:T(8,128)}', space=vmem, size = 0x22000, scoped, tag = 'scratch operand']
  %s0 = inlined_call_operand.vmem [shape: f32[2,256,32], index: 0, kind: input, shape index: {}]
  %s1 = inlined_call_operand.vmem [shape: f32[2,256,32], index: 1, kind: input, shape index: {}]
  %s2 = inlined_call_operand.vmem [shape: f32[2,256,32], index: 2, kind: input, shape index: {}]
  %s3 = inlined_call_operand.vmem [shape: f32[7,32], index: 3, kind: input, shape index: {}]
  %s4 = inlined_call_operand.vmem [shape: f32[1,32], index: 4, kind: input, shape index: {}]
  %s5 = inlined_call_operand.vmem [shape: f32[2,256,32], index: 5, kind: output, shape index: {}]
  %s6 = sld [smem:[#allocation0]]
  $region53: #{tpu_custom_call.1} parent=0
    _
  %s8 = ssub.s32 1, %s6
  %s9 = scalar_select 0, %s8, %s6
  loop: start=0, step=1, limit=4
  $region2: #{tpu_custom_call.1} parent=0 // loop_pre_header
    _
  $region3: #{tpu_custom_call.1} parent=0 // loop_header
    %s11 = sphi 0, %s15
    %p12 = scmp.ge.s32.totalorder %s11, 4
    %s18 = sphi 0, %s37
    %s19 = sphi 0, %s33
    %s20 = sphi 0, %s29
    %s21 = sphi 0, %s18
    %s22 = sphi 0, %s19
    %s23 = sphi 0, %s20
    %s24 = sphi 0, %s21
    %s25 = sphi 0, %s22
    %s26 = sphi 0, %s23
    %s44 = sphi 0, %s46
    %s47 = sphi 0, %s44
    %s48 = sphi 0, %s47
    %s64 = sphi 0, %s48
    %s82 = sphi 0, %s84
    %s85 = sphi 0, %s82
    %s86 = sphi 0, %s85
    %s102 = sphi 0, %s86
    %s120 = sphi 0, %s122
    %s123 = sphi 0, %s120
    %s124 = sphi 0, %s123
    %s140 = sphi 0, %s124
    %s146 = sphi 0, %s148
    %s149 = sphi 0, %s146
    %s150 = sphi 0, %s149
    %s166 = sphi 0, %s150
    %s172 = sphi 0, %s174
    %s175 = sphi 0, %s172
    %s176 = sphi 0, %s175
    %s192 = sphi 0, %s176
    %s202 = sphi 0, %s204
    %s205 = sphi 0, %s202
    %s206 = sphi 0, %s205
    %s222 = sphi 0, %s206
  $region4: #{tpu_custom_call.1} parent=0 // loop_header_branch
    %14 = sbr.rel (%p12) target = $region8
  $region5: #{tpu_custom_call.1} parent=0 // loop_body
    %s16 = ssub.s32 %s11, 1
    %s17 = ssub.s32 %s11, 2
    %s27 = sadd.s32 1, %s20
    %p28 = scmp.ge.s32.totalorder %s27, 1
    %s29 = scalar_select %p28, 0, %s27
    %s30 = sadd.s32 1, %s19
    %s31 = scalar_select %p28, %s30, %s19
    %p32 = scmp.ge.s32.totalorder %s31, 1
    %s33 = scalar_select %p32, 0, %s31
    %s34 = sadd.s32 1, %s18
    %s35 = scalar_select %p32, %s34, %s18
    %p36 = scmp.ge.s32.totalorder %s35, 2
    %s37 = scalar_select %p36, 0, %s35
    %s38 = ssub.s32 %s18, %s37
    %s39 = ssub.s32 %s20, %s29
    %s40 = sor.u32 %s38, %s39
    %s41 = ssub.s32 %s19, %s33
    %s42 = sor.u32 %s40, %s41
    %p43 = scmp.eq.s32.totalorder %s42, 0
    %s45 = sadd.s32 %s44, 1
    %s46 = scalar_select %p43, %s44, %s45
    %p49 = pneg %p43
    %p50 = scmp.eq.s32.totalorder %s11, 1
    %p51 = por %p49, %p50
    %p52 = scmp.ne.s32.totalorder %s44, %s47
    %p53 = scmp.eq.s32.totalorder %s11, 0
    %p54 = por %p52, %p53
    %p55 = scmp.ne.s32.totalorder %s44, %s47
    %p56 = scmp.eq.s32.totalorder %s16, 1
    %p57 = por %p55, %p56
    %p58 = scmp.ne.s32.totalorder %s47, %s48
    %p59 = scmp.eq.s32.totalorder %s16, 0
    %p60 = por %p58, %p59
    %p61 = scmp.ne.s32.totalorder %s47, %s48
    %p62 = scmp.eq.s32.totalorder %s17, 1
    %p63 = por %p61, %p62
    %p65 = scmp.ne.s32.totalorder %s48, %s64
    %p66 = scmp.eq.s32.totalorder %s17, 0
    %p67 = por %p65, %p66
    %s68 = smul.u32 %s20, 32
    %s69 = ssub.s32 %s68, 1
    %p70 = scmp.gt.s32.totalorder %s69, 0
    %s71 = scalar_select %p70, %s69, 0
    %s72 = smul.u32 %s29, 32
    %s73 = ssub.s32 %s72, 1
    %p74 = scmp.gt.s32.totalorder %s73, 0
    %s75 = scalar_select %p74, %s73, 0
    %s76 = ssub.s32 %s18, %s37
    %s77 = ssub.s32 %s71, %s75
    %s78 = sor.u32 %s76, %s77
    %s79 = ssub.s32 %s19, %s33
    %s80 = sor.u32 %s78, %s79
    %p81 = scmp.eq.s32.totalorder %s80, 0
    %s83 = sadd.s32 %s82, 1
    %s84 = scalar_select %p81, %s82, %s83
    %p87 = pneg %p81
    %p88 = scmp.eq.s32.totalorder %s11, 1
    %p89 = por %p87, %p88
    %p90 = scmp.ne.s32.totalorder %s82, %s85
    %p91 = scmp.eq.s32.totalorder %s11, 0
    %p92 = por %p90, %p91
    %p93 = scmp.ne.s32.totalorder %s82, %s85
    %p94 = scmp.eq.s32.totalorder %s16, 1
    %p95 = por %p93, %p94
    %p96 = scmp.ne.s32.totalorder %s85, %s86
    %p97 = scmp.eq.s32.totalorder %s16, 0
    %p98 = por %p96, %p97
    %p99 = scmp.ne.s32.totalorder %s85, %s86
    %p100 = scmp.eq.s32.totalorder %s17, 1
    %p101 = por %p99, %p100
    %p103 = scmp.ne.s32.totalorder %s86, %s102
    %p104 = scmp.eq.s32.totalorder %s17, 0
    %p105 = por %p103, %p104
    %s106 = sadd.s32 %s20, 1
    %s107 = smul.u32 %s106, 32
    %p108 = scmp.lt.s32.totalorder %s107, 31
    %s109 = scalar_select %p108, %s107, 31
    %s110 = sadd.s32 %s29, 1
    %s111 = smul.u32 %s110, 32
    %p112 = scmp.lt.s32.totalorder %s111, 31
    %s113 = scalar_select %p112, %s111, 31
    %s114 = ssub.s32 %s18, %s37
    %s115 = ssub.s32 %s109, %s113
    %s116 = sor.u32 %s114, %s115
    %s117 = ssub.s32 %s19, %s33
    %s118 = sor.u32 %s116, %s117
    %p119 = scmp.eq.s32.totalorder %s118, 0
    %s121 = sadd.s32 %s120, 1
    %s122 = scalar_select %p119, %s120, %s121
    %p125 = pneg %p119
    %p126 = scmp.eq.s32.totalorder %s11, 1
    %p127 = por %p125, %p126
    %p128 = scmp.ne.s32.totalorder %s120, %s123
    %p129 = scmp.eq.s32.totalorder %s11, 0
    %p130 = por %p128, %p129
    %p131 = scmp.ne.s32.totalorder %s120, %s123
    %p132 = scmp.eq.s32.totalorder %s16, 1
    %p133 = por %p131, %p132
    %p134 = scmp.ne.s32.totalorder %s123, %s124
    %p135 = scmp.eq.s32.totalorder %s16, 0
    %p136 = por %p134, %p135
    %p137 = scmp.ne.s32.totalorder %s123, %s124
    %p138 = scmp.eq.s32.totalorder %s17, 1
    %p139 = por %p137, %p138
    %p141 = scmp.ne.s32.totalorder %s124, %s140
    %p142 = scmp.eq.s32.totalorder %s17, 0
    %p143 = por %p141, %p142
    %s144 = ssub.s32 %s19, %s33
    %p145 = scmp.eq.s32.totalorder %s144, 0
    %s147 = sadd.s32 %s146, 1
    %s148 = scalar_select %p145, %s146, %s147
    %p151 = pneg %p145
    %p152 = scmp.eq.s32.totalorder %s11, 1
    %p153 = por %p151, %p152
    %p154 = scmp.ne.s32.totalorder %s146, %s149
    %p155 = scmp.eq.s32.totalorder %s11, 0
    %p156 = por %p154, %p155
    %p157 = scmp.ne.s32.totalorder %s146, %s149
    %p158 = scmp.eq.s32.totalorder %s16, 1
    %p159 = por %p157, %p158
    %p160 = scmp.ne.s32.totalorder %s149, %s150
    %p161 = scmp.eq.s32.totalorder %s16, 0
    %p162 = por %p160, %p161
    %p163 = scmp.ne.s32.totalorder %s149, %s150
    %p164 = scmp.eq.s32.totalorder %s17, 1
    %p165 = por %p163, %p164
    %p167 = scmp.ne.s32.totalorder %s150, %s166
    %p168 = scmp.eq.s32.totalorder %s17, 0
    %p169 = por %p167, %p168
    %s170 = ssub.s32 %s19, %s33
    %p171 = scmp.eq.s32.totalorder %s170, 0
    %s173 = sadd.s32 %s172, 1
    %s174 = scalar_select %p171, %s172, %s173
    %p177 = pneg %p171
    %p178 = scmp.eq.s32.totalorder %s11, 1
    %p179 = por %p177, %p178
    %p180 = scmp.ne.s32.totalorder %s172, %s175
    %p181 = scmp.eq.s32.totalorder %s11, 0
    %p182 = por %p180, %p181
    %p183 = scmp.ne.s32.totalorder %s172, %s175
    %p184 = scmp.eq.s32.totalorder %s16, 1
    %p185 = por %p183, %p184
    %p186 = scmp.ne.s32.totalorder %s175, %s176
    %p187 = scmp.eq.s32.totalorder %s16, 0
    %p188 = por %p186, %p187
    %p189 = scmp.ne.s32.totalorder %s175, %s176
    %p190 = scmp.eq.s32.totalorder %s17, 1
    %p191 = por %p189, %p190
    %p193 = scmp.ne.s32.totalorder %s176, %s192
    %p194 = scmp.eq.s32.totalorder %s17, 0
    %p195 = por %p193, %p194
    %s196 = ssub.s32 %s18, %s37
    %s197 = ssub.s32 %s20, %s29
    %s198 = sor.u32 %s196, %s197
    %s199 = ssub.s32 %s19, %s33
    %s200 = sor.u32 %s198, %s199
    %p201 = scmp.eq.s32.totalorder %s200, 0
    %s203 = sadd.s32 %s202, 1
    %s204 = scalar_select %p201, %s202, %s203
    %p207 = pneg %p201
    %p208 = scmp.eq.s32.totalorder %s11, 1
    %p209 = por %p207, %p208
    %p210 = scmp.ne.s32.totalorder %s202, %s205
    %p211 = scmp.eq.s32.totalorder %s11, 0
    %p212 = por %p210, %p211
    %p213 = scmp.ne.s32.totalorder %s202, %s205
    %p214 = scmp.eq.s32.totalorder %s16, 1
    %p215 = por %p213, %p214
    %p216 = scmp.ne.s32.totalorder %s205, %s206
    %p217 = scmp.eq.s32.totalorder %s16, 0
    %p218 = por %p216, %p217
    %p219 = scmp.ne.s32.totalorder %s205, %s206
    %p220 = scmp.eq.s32.totalorder %s17, 1
    %p221 = por %p219, %p220
    %p223 = scmp.ne.s32.totalorder %s206, %s222
    %p224 = scmp.eq.s32.totalorder %s17, 0
    %p225 = por %p223, %p224
    %p226 = scmp.le.s32.totalorder 1, %s11
    %p227 = scmp.lt.s32.totalorder %s11, 3
    %p228 = pnand %p226, %p227
    %p229 = pneg %p228
    // Predicated region
    $region9: #{tpu_custom_call.1} parent=5 // pred_check
      _
    $region10: #{tpu_custom_call.1} parent=5 // pred_check_branch
      %231 = sbr.rel (%p228) target = $region12
    $region11: #{tpu_custom_call.1} parent=5 // pred_region
      %s232 = ssub.s32 %s11, 1
      // Predicated region
      $region13: #{tpu_custom_call.1} parent=11 // pred_check
        %p233 = pneg %p162
      $region14: #{tpu_custom_call.1} parent=11 // pred_check_branch
        %235 = sbr.rel (%p233) target = $region16
      $region15: #{tpu_custom_call.1} parent=11 // pred_region
        %p236 = scmp.lt.s32.totalorder %s22, 0
        %s237 = scalar_select %p236, %s22, 0
        %s238 = smul.addr %s237, 8
        %s239 = scalar_lea.vmem %s3, %s238
      $region16: #{tpu_custom_call.1} parent=11 // pred_fallthru
        _
      // Predicated region
      $region17: #{tpu_custom_call.1} parent=11 // pred_check
        %p240 = pneg %p188
      $region18: #{tpu_custom_call.1} parent=11 // pred_check_branch
        %242 = sbr.rel (%p240) target = $region20
      $region19: #{tpu_custom_call.1} parent=11 // pred_region
        %p243 = scmp.lt.s32.totalorder %s22, 0
        %s244 = scalar_select %p243, %s22, 0
        %s245 = scalar_lea.vmem %s4, %s244
      $region20: #{tpu_custom_call.1} parent=11 // pred_fallthru
        _
    $region12: #{tpu_custom_call.1} parent=5 // pred_fallthru
      _
    %p246 = scmp.lt.s32.totalorder %s11, 2
    // Predicated region
    $region21: #{tpu_custom_call.1} parent=5 // pred_check
      %p247 = pneg %p246
    $region22: #{tpu_custom_call.1} parent=5 // pred_check_branch
      %249 = sbr.rel (%p247) target = $region24
    $region23: #{tpu_custom_call.1} parent=5 // pred_region
      // Predicated region
      $region25: #{tpu_custom_call.1} parent=23 // pred_check
        %p250 = pneg %p54
      $region26: #{tpu_custom_call.1} parent=23 // pred_check_branch
        %252 = sbr.rel (%p250) target = $region28
      $region27: #{tpu_custom_call.1} parent=23 // pred_region
        %s253 = smul.u32 32, %s20
        %p254 = scmp.lt.s32.totalorder %s18, 1
        %s255 = scalar_select %p254, %s18, 1
        %p256 = scmp.lt.s32.totalorder %s253, 31
        %s257 = scalar_select %p256, %s253, 31
        %p258 = scmp.lt.s32.totalorder %s19, 0
        %s259 = scalar_select %p258, %s19, 0
        %s260 = sadd.s32 %s259, %s257
        %s261 = smul.addr %s255, 32
        %s262 = sadd.s32 %s260, %s261
        %s263 = smul.addr %s262, 8
        %s264 = scalar_lea.vmem %s0, %s263
        %s265 = smul.u32 32, %s20
      $region28: #{tpu_custom_call.1} parent=23 // pred_fallthru
        _
      // Predicated region
      $region29: #{tpu_custom_call.1} parent=23 // pred_check
        %p266 = pneg %p92
      $region30: #{tpu_custom_call.1} parent=23 // pred_check_branch
        %268 = sbr.rel (%p266) target = $region32
      $region31: #{tpu_custom_call.1} parent=23 // pred_region
        %s269 = smul.u32 %s20, 32
        %s270 = ssub.s32 %s269, 1
        %p271 = scmp.gt.s32.totalorder %s270, 0
        %s272 = scalar_select %p271, %s270, 0
        %p273 = scmp.lt.s32.totalorder %s18, 1
        %s274 = scalar_select %p273, %s18, 1
        %p275 = scmp.lt.s32.totalorder %s272, 31
        %s276 = scalar_select %p275, %s272, 31
        %p277 = scmp.lt.s32.totalorder %s19, 0
        %s278 = scalar_select %p277, %s19, 0
        %s279 = sadd.s32 %s278, %s276
        %s280 = smul.addr %s274, 32
        %s281 = sadd.s32 %s279, %s280
        %s282 = smul.addr %s281, 8
        %s283 = scalar_lea.vmem %s1, %s282
        %s284 = smul.u32 %s20, 32
        %s285 = ssub.s32 %s284, 1
        %p286 = scmp.gt.s32.totalorder %s285, 0
        %s287 = scalar_select %p286, %s285, 0
      $region32: #{tpu_custom_call.1} parent=23 // pred_fallthru
        _
      // Predicated region
      $region33: #{tpu_custom_call.1} parent=23 // pred_check
        %p288 = pneg %p130
      $region34: #{tpu_custom_call.1} parent=23 // pred_check_branch
        %290 = sbr.rel (%p288) target = $region36
      $region35: #{tpu_custom_call.1} parent=23 // pred_region
        %s291 = sadd.s32 %s20, 1
        %s292 = smul.u32 %s291, 32
        %p293 = scmp.lt.s32.totalorder %s292, 31
        %s294 = scalar_select %p293, %s292, 31
        %p295 = scmp.lt.s32.totalorder %s18, 1
        %s296 = scalar_select %p295, %s18, 1
        %p297 = scmp.lt.s32.totalorder %s294, 31
        %s298 = scalar_select %p297, %s294, 31
        %p299 = scmp.lt.s32.totalorder %s19, 0
        %s300 = scalar_select %p299, %s19, 0
        %s301 = sadd.s32 %s300, %s298
        %s302 = smul.addr %s296, 32
        %s303 = sadd.s32 %s301, %s302
        %s304 = smul.addr %s303, 8
        %s305 = scalar_lea.vmem %s2, %s304
        %s306 = sadd.s32 %s20, 1
        %s307 = smul.u32 %s306, 32
        %p308 = scmp.lt.s32.totalorder %s307, 31
        %s309 = scalar_select %p308, %s307, 31
      $region36: #{tpu_custom_call.1} parent=23 // pred_fallthru
        _
    $region24: #{tpu_custom_call.1} parent=5 // pred_fallthru
      _
    %p310 = scmp.le.s32.totalorder 1, %s11
    %p311 = scmp.lt.s32.totalorder %s11, 3
    %p312 = pnand %p310, %p311
    %p313 = pneg %p312
    // Predicated region
    $region37: #{tpu_custom_call.1} parent=5 // pred_check
      _
    $region38: #{tpu_custom_call.1} parent=5 // pred_check_branch
      %315 = sbr.rel (%p312) target = $region40
    $region39: #{tpu_custom_call.1} parent=5 // pred_region
      %s316 = ssub.s32 %s11, 1
      %s317 = smul.u32 32, %s23
      %p318 = scmp.lt.s32.totalorder %s21, 1
      %s319 = scalar_select %p318, %s21, 1
      %p320 = scmp.lt.s32.totalorder %s317, 31
      %s321 = scalar_select %p320, %s317, 31
      %p322 = scmp.lt.s32.totalorder %s22, 0
      %s323 = scalar_select %p322, %s22, 0
      %s324 = sadd.s32 %s323, %s321
      %s325 = smul.addr %s319, 32
      %s326 = sadd.s32 %s324, %s325
      %s327 = smul.addr %s326, 8
      %s328 = scalar_lea.vmem %s0, %s327
      %p329 = pneg %p60
      %p330 = pneg %p57
      %s331 = smul.u32 %s23, 32
      %s332 = ssub.s32 %s331, 1
      %p333 = scmp.gt.s32.totalorder %s332, 0
      %s334 = scalar_select %p333, %s332, 0
      %p335 = scmp.lt.s32.totalorder %s21, 1
      %s336 = scalar_select %p335, %s21, 1
      %p337 = scmp.lt.s32.totalorder %s334, 31
      %s338 = scalar_select %p337, %s334, 31
      %p339 = scmp.lt.s32.totalorder %s22, 0
      %s340 = scalar_select %p339, %s22, 0
      %s341 = sadd.s32 %s340, %s338
      %s342 = smul.addr %s336, 32
      %s343 = sadd.s32 %s341, %s342
      %s344 = smul.addr %s343, 8
      %s345 = scalar_lea.vmem %s1, %s344
      %p346 = pneg %p98
      %p347 = pneg %p95
      %s348 = sadd.s32 %s23, 1
      %s349 = smul.u32 %s348, 32
      %p350 = scmp.lt.s32.totalorder %s349, 31
      %s351 = scalar_select %p350, %s349, 31
      %p352 = scmp.lt.s32.totalorder %s21, 1
      %s353 = scalar_select %p352, %s21, 1
      %p354 = scmp.lt.s32.totalorder %s351, 31
      %s355 = scalar_select %p354, %s351, 31
      %p356 = scmp.lt.s32.totalorder %s22, 0
      %s357 = scalar_select %p356, %s22, 0
      %s358 = sadd.s32 %s357, %s355
      %s359 = smul.addr %s353, 32
      %s360 = sadd.s32 %s358, %s359
      %s361 = smul.addr %s360, 8
      %s362 = scalar_lea.vmem %s2, %s361
      %p363 = pneg %p136
      %p364 = pneg %p133
      %p365 = scmp.lt.s32.totalorder %s22, 0
      %s366 = scalar_select %p365, %s22, 0
      %s367 = smul.addr %s366, 8
      %s368 = scalar_lea.vmem %s3, %s367
      %p369 = pneg %p162
      %p370 = pneg %p159
      %p371 = scmp.lt.s32.totalorder %s22, 0
      %s372 = scalar_select %p371, %s22, 0
      %s373 = scalar_lea.vmem %s4, %s372
      %p374 = pneg %p188
      %p375 = pneg %p185
      %p376 = pneg %p218
      %p377 = pneg %p215
      %s378 = smul.u32 32, %s23
      %p379 = scmp.lt.s32.totalorder %s21, 1
      %s380 = scalar_select %p379, %s21, 1
      %p381 = scmp.lt.s32.totalorder %s378, 31
      %s382 = scalar_select %p381, %s378, 31
      %p383 = scmp.lt.s32.totalorder %s22, 0
      %s384 = scalar_select %p383, %s22, 0
      %s385 = sadd.s32 %s384, %s382
      %s386 = smul.addr %s380, 32
      %s387 = sadd.s32 %s385, %s386
      %s388 = smul.addr %s387, 8
      %s389 = scalar_lea.vmem %s5, %s388
      %s390 = smul.u32 32, %s23
      %p391 = scmp.lt.s32.totalorder %s21, 1
      %s392 = scalar_select %p391, %s21, 1
      %p393 = scmp.lt.s32.totalorder %s390, 31
      %s394 = scalar_select %p393, %s390, 31
      %p395 = scmp.lt.s32.totalorder %s22, 0
      %s396 = scalar_select %p395, %s22, 0
      %s397 = sadd.s32 %s396, %s394
      %s398 = smul.addr %s392, 32
      %s399 = sadd.s32 %s397, %s398
      %s400 = smul.addr %s399, 8
      %s401 = scalar_lea.vmem %s0, %s400
      %s402 = smul.u32 32, %s23
      %s403 = smul.u32 %s23, 32
      %s404 = ssub.s32 %s403, 1
      %p405 = scmp.gt.s32.totalorder %s404, 0
      %s406 = scalar_select %p405, %s404, 0
      %p407 = scmp.lt.s32.totalorder %s21, 1
      %s408 = scalar_select %p407, %s21, 1
      %p409 = scmp.lt.s32.totalorder %s406, 31
      %s410 = scalar_select %p409, %s406, 31
      %p411 = scmp.lt.s32.totalorder %s22, 0
      %s412 = scalar_select %p411, %s22, 0
      %s413 = sadd.s32 %s412, %s410
      %s414 = smul.addr %s408, 32
      %s415 = sadd.s32 %s413, %s414
      %s416 = smul.addr %s415, 8
      %s417 = scalar_lea.vmem %s1, %s416
      %s418 = smul.u32 %s23, 32
      %s419 = ssub.s32 %s418, 1
      %p420 = scmp.gt.s32.totalorder %s419, 0
      %s421 = scalar_select %p420, %s419, 0
      %s422 = sadd.s32 %s23, 1
      %s423 = smul.u32 %s422, 32
      %p424 = scmp.lt.s32.totalorder %s423, 31
      %s425 = scalar_select %p424, %s423, 31
      %p426 = scmp.lt.s32.totalorder %s21, 1
      %s427 = scalar_select %p426, %s21, 1
      %p428 = scmp.lt.s32.totalorder %s425, 31
      %s429 = scalar_select %p428, %s425, 31
      %p430 = scmp.lt.s32.totalorder %s22, 0
      %s431 = scalar_select %p430, %s22, 0
      %s432 = sadd.s32 %s431, %s429
      %s433 = smul.addr %s427, 32
      %s434 = sadd.s32 %s432, %s433
      %s435 = smul.addr %s434, 8
      %s436 = scalar_lea.vmem %s2, %s435
      %s437 = sadd.s32 %s23, 1
      %s438 = smul.u32 %s437, 32
      %p439 = scmp.lt.s32.totalorder %s438, 31
      %s440 = scalar_select %p439, %s438, 31
      %p441 = scmp.lt.s32.totalorder %s22, 0
      %s442 = scalar_select %p441, %s22, 0
      %s443 = smul.addr %s442, 8
      %s444 = scalar_lea.vmem %s3, %s443
      %p445 = scmp.lt.s32.totalorder %s22, 0
      %s446 = scalar_select %p445, %s22, 0
      %s447 = scalar_lea.vmem %s4, %s446
      %s448 = smul.u32 32, %s23
      %p449 = scmp.lt.s32.totalorder %s21, 1
      %s450 = scalar_select %p449, %s21, 1
      %p451 = scmp.lt.s32.totalorder %s448, 31
      %s452 = scalar_select %p451, %s448, 31
      %p453 = scmp.lt.s32.totalorder %s22, 0
      %s454 = scalar_select %p453, %s22, 0
      %s455 = sadd.s32 %s454, %s452
      %s456 = smul.addr %s450, 32
      %s457 = sadd.s32 %s455, %s456
      %s458 = smul.addr %s457, 8
      %s459 = scalar_lea.vmem %s5, %s458
      %s460 = smul.u32 32, %s23
      %p461 = scmp.eq.s32.totalorder %s23, 0
      %s462 = scalar_select %p461, 0.0, 1.0
      %v463 = vld [vmem:[%s417] sm:$0xff]
      %v464 = vstv %s462
      %v465 = vmul.f32 %v463, %v464
      %vm466 = vcmask 261120
      %467 = vst.msk [vmem:[#allocation2] sm:$0xff] %vm466, %v465
      %v468 = vld [vmem:[%s401] sm:$0xff]
      %v469 = vld [vmem:[%s401 + $0x8] sm:$0xff]
      %v470 = vld [vmem:[%s401 + $0x10] sm:$0xff]
      %v471 = vld [vmem:[%s401 + $0x18] sm:$0xff]
      %v472 = vld [vmem:[%s401 + $0x20] sm:$0xff]
      %v473 = vld [vmem:[%s401 + $0x28] sm:$0xff]
      %v474 = vld [vmem:[%s401 + $0x30] sm:$0xff]
      %v475 = vld [vmem:[%s401 + $0x38] sm:$0xff]
      %v476 = vld [vmem:[%s401 + $0x40] sm:$0xff]
      %v477 = vld [vmem:[%s401 + $0x48] sm:$0xff]
      %v478 = vld [vmem:[%s401 + $0x50] sm:$0xff]
      %v479 = vld [vmem:[%s401 + $0x58] sm:$0xff]
      %v480 = vld [vmem:[%s401 + $0x60] sm:$0xff]
      %v481 = vld [vmem:[%s401 + $0x68] sm:$0xff]
      %v482 = vld [vmem:[%s401 + $0x70] sm:$0xff]
      %v483 = vld [vmem:[%s401 + $0x78] sm:$0xff]
      %v484 = vld [vmem:[%s401 + $0x80] sm:$0xff]
      %v485 = vld [vmem:[%s401 + $0x88] sm:$0xff]
      %v486 = vld [vmem:[%s401 + $0x90] sm:$0xff]
      %v487 = vld [vmem:[%s401 + $0x98] sm:$0xff]
      %v488 = vld [vmem:[%s401 + $0xa0] sm:$0xff]
      %v489 = vld [vmem:[%s401 + $0xa8] sm:$0xff]
      %v490 = vld [vmem:[%s401 + $0xb0] sm:$0xff]
      %v491 = vld [vmem:[%s401 + $0xb8] sm:$0xff]
      %v492 = vld [vmem:[%s401 + $0xc0] sm:$0xff]
      %v493 = vld [vmem:[%s401 + $0xc8] sm:$0xff]
      %v494 = vld [vmem:[%s401 + $0xd0] sm:$0xff]
      %v495 = vld [vmem:[%s401 + $0xd8] sm:$0xff]
      %v496 = vld [vmem:[%s401 + $0xe0] sm:$0xff]
      %v497 = vld [vmem:[%s401 + $0xe8] sm:$0xff]
      %v498 = vld [vmem:[%s401 + $0xf0] sm:$0xff]
      %v499 = vld [vmem:[%s401 + $0xf8] sm:$0xff]
      %500 = vst.msk [vmem:[#allocation2 + $0x8] sm:$0xff] %vm466, %v468
      %501 = vst.msk [vmem:[#allocation2 + $0x10] sm:$0xff] %vm466, %v469
      %502 = vst.msk [vmem:[#allocation2 + $0x18] sm:$0xff] %vm466, %v470
      %503 = vst.msk [vmem:[#allocation2 + $0x20] sm:$0xff] %vm466, %v471
      %504 = vst.msk [vmem:[#allocation2 + $0x28] sm:$0xff] %vm466, %v472
      %505 = vst.msk [vmem:[#allocation2 + $0x30] sm:$0xff] %vm466, %v473
      %506 = vst.msk [vmem:[#allocation2 + $0x38] sm:$0xff] %vm466, %v474
      %507 = vst.msk [vmem:[#allocation2 + $0x40] sm:$0xff] %vm466, %v475
      %508 = vst.msk [vmem:[#allocation2 + $0x48] sm:$0xff] %vm466, %v476
      %509 = vst.msk [vmem:[#allocation2 + $0x50] sm:$0xff] %vm466, %v477
      %510 = vst.msk [vmem:[#allocation2 + $0x58] sm:$0xff] %vm466, %v478
      %511 = vst.msk [vmem:[#allocation2 + $0x60] sm:$0xff] %vm466, %v479
      %512 = vst.msk [vmem:[#allocation2 + $0x68] sm:$0xff] %vm466, %v480
      %513 = vst.msk [vmem:[#allocation2 + $0x70] sm:$0xff] %vm466, %v481
      %514 = vst.msk [vmem:[#allocation2 + $0x78] sm:$0xff] %vm466, %v482
      %515 = vst.msk [vmem:[#allocation2 + $0x80] sm:$0xff] %vm466, %v483
      %516 = vst.msk [vmem:[#allocation2 + $0x88] sm:$0xff] %vm466, %v484
      %517 = vst.msk [vmem:[#allocation2 + $0x90] sm:$0xff] %vm466, %v485
      %518 = vst.msk [vmem:[#allocation2 + $0x98] sm:$0xff] %vm466, %v486
      %519 = vst.msk [vmem:[#allocation2 + $0xa0] sm:$0xff] %vm466, %v487
      %520 = vst.msk [vmem:[#allocation2 + $0xa8] sm:$0xff] %vm466, %v488
      %521 = vst.msk [vmem:[#allocation2 + $0xb0] sm:$0xff] %vm466, %v489
      %522 = vst.msk [vmem:[#allocation2 + $0xb8] sm:$0xff] %vm466, %v490
      %523 = vst.msk [vmem:[#allocation2 + $0xc0] sm:$0xff] %vm466, %v491
      %524 = vst.msk [vmem:[#allocation2 + $0xc8] sm:$0xff] %vm466, %v492
      %525 = vst.msk [vmem:[#allocation2 + $0xd0] sm:$0xff] %vm466, %v493
      %526 = vst.msk [vmem:[#allocation2 + $0xd8] sm:$0xff] %vm466, %v494
      %527 = vst.msk [vmem:[#allocation2 + $0xe0] sm:$0xff] %vm466, %v495
      %528 = vst.msk [vmem:[#allocation2 + $0xe8] sm:$0xff] %vm466, %v496
      %529 = vst.msk [vmem:[#allocation2 + $0xf0] sm:$0xff] %vm466, %v497
      %530 = vst.msk [vmem:[#allocation2 + $0xf8] sm:$0xff] %vm466, %v498
      %531 = vst.msk [vmem:[#allocation2 + $0x100] sm:$0xff] %vm466, %v499
      %v532 = vld [vmem:[%s436] sm:$0xff]
      %v533 = vmul.f32 %v532, %v464
      %534 = vst.msk [vmem:[#allocation2 + $0x108] sm:$0xff] %vm466, %v533
      %v535 = vld [vmem:[%s444] sm:$0x7f]
      %v536 = vld [vmem:[#allocation2 + $0x5] sm:$0xff]
      %v537 = vld [vmem:[#allocation2 + $0xd] sm:$0xff]
      %v538 = vld [vmem:[#allocation2 + $0x15] sm:$0xff]
      %v539 = vld [vmem:[#allocation2 + $0x1d] sm:$0xff]
      %v540 = vld [vmem:[#allocation2 + $0x25] sm:$0xff]
      %v541 = vld [vmem:[#allocation2 + $0x2d] sm:$0xff]
      %v542 = vld [vmem:[#allocation2 + $0x35] sm:$0xff]
      %v543 = vld [vmem:[#allocation2 + $0x3d] sm:$0xff]
      %v544 = vld [vmem:[#allocation2 + $0x45] sm:$0xff]
      %v545 = vld [vmem:[#allocation2 + $0x4d] sm:$0xff]
      %v546 = vld [vmem:[#allocation2 + $0x55] sm:$0xff]
      %v547 = vld [vmem:[#allocation2 + $0x5d] sm:$0xff]
      %v548 = vld [vmem:[#allocation2 + $0x65] sm:$0xff]
      %v549 = vld [vmem:[#allocation2 + $0x6d] sm:$0xff]
      %v550 = vld [vmem:[#allocation2 + $0x75] sm:$0xff]
      %v551 = vld [vmem:[#allocation2 + $0x7d] sm:$0xff]
      %v552 = vld [vmem:[#allocation2 + $0x85] sm:$0xff]
      %v553 = vld [vmem:[#allocation2 + $0x8d] sm:$0xff]
      %v554 = vld [vmem:[#allocation2 + $0x95] sm:$0xff]
      %v555 = vld [vmem:[#allocation2 + $0x9d] sm:$0xff]
      %v556 = vld [vmem:[#allocation2 + $0xa5] sm:$0xff]
      %v557 = vld [vmem:[#allocation2 + $0xad] sm:$0xff]
      %v558 = vld [vmem:[#allocation2 + $0xb5] sm:$0xff]
      %v559 = vld [vmem:[#allocation2 + $0xbd] sm:$0xff]
      %v560 = vld [vmem:[#allocation2 + $0xc5] sm:$0xff]
      %v561 = vld [vmem:[#allocation2 + $0xcd] sm:$0xff]
      %v562 = vld [vmem:[#allocation2 + $0xd5] sm:$0xff]
      %v563 = vld [vmem:[#allocation2 + $0xdd] sm:$0xff]
      %v564 = vld [vmem:[#allocation2 + $0xe5] sm:$0xff]
      %v565 = vld [vmem:[#allocation2 + $0xed] sm:$0xff]
      %v566 = vld [vmem:[#allocation2 + $0xf5] sm:$0xff]
      %v567 = vld [vmem:[#allocation2 + $0xfd] sm:$0xff]
      %v568 = vlaneseq
      %v569 = vshrl.u32 %v568, 7
      %v570 = vsub.s32 0, %v569
      %v571 = vrot.slane %v535, %v570
      %v572 = vmul.f32 %v536, %v571
      %v573 = vmul.f32 %v537, %v571
      %v574 = vmul.f32 %v538, %v571
      %v575 = vmul.f32 %v539, %v571
      %v576 = vmul.f32 %v540, %v571
      %v577 = vmul.f32 %v541, %v571
      %v578 = vmul.f32 %v542, %v571
      %v579 = vmul.f32 %v543, %v571
      %v580 = vmul.f32 %v544, %v571
      %v581 = vmul.f32 %v545, %v571
      %v582 = vmul.f32 %v546, %v571
      %v583 = vmul.f32 %v547, %v571
      %v584 = vmul.f32 %v548, %v571
      %v585 = vmul.f32 %v549, %v571
      %v586 = vmul.f32 %v550, %v571
      %v587 = vmul.f32 %v551, %v571
      %v588 = vmul.f32 %v552, %v571
      %v589 = vmul.f32 %v553, %v571
      %v590 = vmul.f32 %v554, %v571
      %v591 = vmul.f32 %v555, %v571
      %v592 = vmul.f32 %v556, %v571
      %v593 = vmul.f32 %v557, %v571
      %v594 = vmul.f32 %v558, %v571
      %v595 = vmul.f32 %v559, %v571
      %v596 = vmul.f32 %v560, %v571
      %v597 = vmul.f32 %v561, %v571
      %v598 = vmul.f32 %v562, %v571
      %v599 = vmul.f32 %v563, %v571
      %v600 = vmul.f32 %v564, %v571
      %v601 = vmul.f32 %v565, %v571
      %v602 = vmul.f32 %v566, %v571
      %v603 = vmul.f32 %v567, %v571
      %v604 = vld [vmem:[#allocation2 + $0x6] sm:$0xff]
      %v605 = vld [vmem:[#allocation2 + $0xe] sm:$0xff]
      %v606 = vld [vmem:[#allocation2 + $0x16] sm:$0xff]
      %v607 = vld [vmem:[#allocation2 + $0x1e] sm:$0xff]
      %v608 = vld [vmem:[#allocation2 + $0x26] sm:$0xff]
      %v609 = vld [vmem:[#allocation2 + $0x2e] sm:$0xff]
      %v610 = vld [vmem:[#allocation2 + $0x36] sm:$0xff]
      %v611 = vld [vmem:[#allocation2 + $0x3e] sm:$0xff]
      %v612 = vld [vmem:[#allocation2 + $0x46] sm:$0xff]
      %v613 = vld [vmem:[#allocation2 + $0x4e] sm:$0xff]
      %v614 = vld [vmem:[#allocation2 + $0x56] sm:$0xff]
      %v615 = vld [vmem:[#allocation2 + $0x5e] sm:$0xff]
      %v616 = vld [vmem:[#allocation2 + $0x66] sm:$0xff]
      %v617 = vld [vmem:[#allocation2 + $0x6e] sm:$0xff]
      %v618 = vld [vmem:[#allocation2 + $0x76] sm:$0xff]
      %v619 = vld [vmem:[#allocation2 + $0x7e] sm:$0xff]
      %v620 = vld [vmem:[#allocation2 + $0x86] sm:$0xff]
      %v621 = vld [vmem:[#allocation2 + $0x8e] sm:$0xff]
      %v622 = vld [vmem:[#allocation2 + $0x96] sm:$0xff]
      %v623 = vld [vmem:[#allocation2 + $0x9e] sm:$0xff]
      %v624 = vld [vmem:[#allocation2 + $0xa6] sm:$0xff]
      %v625 = vld [vmem:[#allocation2 + $0xae] sm:$0xff]
      %v626 = vld [vmem:[#allocation2 + $0xb6] sm:$0xff]
      %v627 = vld [vmem:[#allocation2 + $0xbe] sm:$0xff]
      %v628 = vld [vmem:[#allocation2 + $0xc6] sm:$0xff]
      %v629 = vld [vmem:[#allocation2 + $0xce] sm:$0xff]
      %v630 = vld [vmem:[#allocation2 + $0xd6] sm:$0xff]
      %v631 = vld [vmem:[#allocation2 + $0xde] sm:$0xff]
      %v632 = vld [vmem:[#allocation2 + $0xe6] sm:$0xff]
      %v633 = vld [vmem:[#allocation2 + $0xee] sm:$0xff]
      %v634 = vld [vmem:[#allocation2 + $0xf6] sm:$0xff]
      %v635 = vld [vmem:[#allocation2 + $0xfe] sm:$0xff]
      %v636 = vlaneseq
      %v637 = vshrl.u32 %v636, 7
      %v638 = vsub.s32 1, %v637
      %v639 = vrot.slane %v535, %v638
      %v640 = vmul.f32 %v604, %v639
      %v641 = vmul.f32 %v605, %v639
      %v642 = vmul.f32 %v606, %v639
      %v643 = vmul.f32 %v607, %v639
      %v644 = vmul.f32 %v608, %v639
      %v645 = vmul.f32 %v609, %v639
      %v646 = vmul.f32 %v610, %v639
      %v647 = vmul.f32 %v611, %v639
      %v648 = vmul.f32 %v612, %v639
      %v649 = vmul.f32 %v613, %v639
      %v650 = vmul.f32 %v614, %v639
      %v651 = vmul.f32 %v615, %v639
      %v652 = vmul.f32 %v616, %v639
      %v653 = vmul.f32 %v617, %v639
      %v654 = vmul.f32 %v618, %v639
      %v655 = vmul.f32 %v619, %v639
      %v656 = vmul.f32 %v620, %v639
      %v657 = vmul.f32 %v621, %v639
      %v658 = vmul.f32 %v622, %v639
      %v659 = vmul.f32 %v623, %v639
      %v660 = vmul.f32 %v624, %v639
      %v661 = vmul.f32 %v625, %v639
      %v662 = vmul.f32 %v626, %v639
      %v663 = vmul.f32 %v627, %v639
      %v664 = vmul.f32 %v628, %v639
      %v665 = vmul.f32 %v629, %v639
      %v666 = vmul.f32 %v630, %v639
      %v667 = vmul.f32 %v631, %v639
      %v668 = vmul.f32 %v632, %v639
      %v669 = vmul.f32 %v633, %v639
      %v670 = vmul.f32 %v634, %v639
      %v671 = vmul.f32 %v635, %v639
      %v672 = vadd.f32 %v572, %v640
      %v673 = vadd.f32 %v573, %v641
      %v674 = vadd.f32 %v574, %v642
      %v675 = vadd.f32 %v575, %v643
      %v676 = vadd.f32 %v576, %v644
      %v677 = vadd.f32 %v577, %v645
      %v678 = vadd.f32 %v578, %v646
      %v679 = vadd.f32 %v579, %v647
      %v680 = vadd.f32 %v580, %v648
      %v681 = vadd.f32 %v581, %v649
      %v682 = vadd.f32 %v582, %v650
      %v683 = vadd.f32 %v583, %v651
      %v684 = vadd.f32 %v584, %v652
      %v685 = vadd.f32 %v585, %v653
      %v686 = vadd.f32 %v586, %v654
      %v687 = vadd.f32 %v587, %v655
      %v688 = vadd.f32 %v588, %v656
      %v689 = vadd.f32 %v589, %v657
      %v690 = vadd.f32 %v590, %v658
      %v691 = vadd.f32 %v591, %v659
      %v692 = vadd.f32 %v592, %v660
      %v693 = vadd.f32 %v593, %v661
      %v694 = vadd.f32 %v594, %v662
      %v695 = vadd.f32 %v595, %v663
      %v696 = vadd.f32 %v596, %v664
      %v697 = vadd.f32 %v597, %v665
      %v698 = vadd.f32 %v598, %v666
      %v699 = vadd.f32 %v599, %v667
      %v700 = vadd.f32 %v600, %v668
      %v701 = vadd.f32 %v601, %v669
      %v702 = vadd.f32 %v602, %v670
      %v703 = vadd.f32 %v603, %v671
      %v704 = vld [vmem:[#allocation2 + $0x7] sm:$0xff]
      %v705 = vld [vmem:[#allocation2 + $0xf] sm:$0xff]
      %v706 = vld [vmem:[#allocation2 + $0x17] sm:$0xff]
      %v707 = vld [vmem:[#allocation2 + $0x1f] sm:$0xff]
      %v708 = vld [vmem:[#allocation2 + $0x27] sm:$0xff]
      %v709 = vld [vmem:[#allocation2 + $0x2f] sm:$0xff]
      %v710 = vld [vmem:[#allocation2 + $0x37] sm:$0xff]
      %v711 = vld [vmem:[#allocation2 + $0x3f] sm:$0xff]
      %v712 = vld [vmem:[#allocation2 + $0x47] sm:$0xff]
      %v713 = vld [vmem:[#allocation2 + $0x4f] sm:$0xff]
      %v714 = vld [vmem:[#allocation2 + $0x57] sm:$0xff]
      %v715 = vld [vmem:[#allocation2 + $0x5f] sm:$0xff]
      %v716 = vld [vmem:[#allocation2 + $0x67] sm:$0xff]
      %v717 = vld [vmem:[#allocation2 + $0x6f] sm:$0xff]
      %v718 = vld [vmem:[#allocation2 + $0x77] sm:$0xff]
      %v719 = vld [vmem:[#allocation2 + $0x7f] sm:$0xff]
      %v720 = vld [vmem:[#allocation2 + $0x87] sm:$0xff]
      %v721 = vld [vmem:[#allocation2 + $0x8f] sm:$0xff]
      %v722 = vld [vmem:[#allocation2 + $0x97] sm:$0xff]
      %v723 = vld [vmem:[#allocation2 + $0x9f] sm:$0xff]
      %v724 = vld [vmem:[#allocation2 + $0xa7] sm:$0xff]
      %v725 = vld [vmem:[#allocation2 + $0xaf] sm:$0xff]
      %v726 = vld [vmem:[#allocation2 + $0xb7] sm:$0xff]
      %v727 = vld [vmem:[#allocation2 + $0xbf] sm:$0xff]
      %v728 = vld [vmem:[#allocation2 + $0xc7] sm:$0xff]
      %v729 = vld [vmem:[#allocation2 + $0xcf] sm:$0xff]
      %v730 = vld [vmem:[#allocation2 + $0xd7] sm:$0xff]
      %v731 = vld [vmem:[#allocation2 + $0xdf] sm:$0xff]
      %v732 = vld [vmem:[#allocation2 + $0xe7] sm:$0xff]
      %v733 = vld [vmem:[#allocation2 + $0xef] sm:$0xff]
      %v734 = vld [vmem:[#allocation2 + $0xf7] sm:$0xff]
      %v735 = vld [vmem:[#allocation2 + $0xff] sm:$0xff]
      %v736 = vlaneseq
      %v737 = vshrl.u32 %v736, 7
      %v738 = vsub.s32 2, %v737
      %v739 = vrot.slane %v535, %v738
      %v740 = vmul.f32 %v704, %v739
      %v741 = vmul.f32 %v705, %v739
      %v742 = vmul.f32 %v706, %v739
      %v743 = vmul.f32 %v707, %v739
      %v744 = vmul.f32 %v708, %v739
      %v745 = vmul.f32 %v709, %v739
      %v746 = vmul.f32 %v710, %v739
      %v747 = vmul.f32 %v711, %v739
      %v748 = vmul.f32 %v712, %v739
      %v749 = vmul.f32 %v713, %v739
      %v750 = vmul.f32 %v714, %v739
      %v751 = vmul.f32 %v715, %v739
      %v752 = vmul.f32 %v716, %v739
      %v753 = vmul.f32 %v717, %v739
      %v754 = vmul.f32 %v718, %v739
      %v755 = vmul.f32 %v719, %v739
      %v756 = vmul.f32 %v720, %v739
      %v757 = vmul.f32 %v721, %v739
      %v758 = vmul.f32 %v722, %v739
      %v759 = vmul.f32 %v723, %v739
      %v760 = vmul.f32 %v724, %v739
      %v761 = vmul.f32 %v725, %v739
      %v762 = vmul.f32 %v726, %v739
      %v763 = vmul.f32 %v727, %v739
      %v764 = vmul.f32 %v728, %v739
      %v765 = vmul.f32 %v729, %v739
      %v766 = vmul.f32 %v730, %v739
      %v767 = vmul.f32 %v731, %v739
      %v768 = vmul.f32 %v732, %v739
      %v769 = vmul.f32 %v733, %v739
      %v770 = vmul.f32 %v734, %v739
      %v771 = vmul.f32 %v735, %v739
      %v772 = vadd.f32 %v672, %v740
      %v773 = vadd.f32 %v673, %v741
      %v774 = vadd.f32 %v674, %v742
      %v775 = vadd.f32 %v675, %v743
      %v776 = vadd.f32 %v676, %v744
      %v777 = vadd.f32 %v677, %v745
      %v778 = vadd.f32 %v678, %v746
      %v779 = vadd.f32 %v679, %v747
      %v780 = vadd.f32 %v680, %v748
      %v781 = vadd.f32 %v681, %v749
      %v782 = vadd.f32 %v682, %v750
      %v783 = vadd.f32 %v683, %v751
      %v784 = vadd.f32 %v684, %v752
      %v785 = vadd.f32 %v685, %v753
      %v786 = vadd.f32 %v686, %v754
      %v787 = vadd.f32 %v687, %v755
      %v788 = vadd.f32 %v688, %v756
      %v789 = vadd.f32 %v689, %v757
      %v790 = vadd.f32 %v690, %v758
      %v791 = vadd.f32 %v691, %v759
      %v792 = vadd.f32 %v692, %v760
      %v793 = vadd.f32 %v693, %v761
      %v794 = vadd.f32 %v694, %v762
      %v795 = vadd.f32 %v695, %v763
      %v796 = vadd.f32 %v696, %v764
      %v797 = vadd.f32 %v697, %v765
      %v798 = vadd.f32 %v698, %v766
      %v799 = vadd.f32 %v699, %v767
      %v800 = vadd.f32 %v700, %v768
      %v801 = vadd.f32 %v701, %v769
      %v802 = vadd.f32 %v702, %v770
      %v803 = vadd.f32 %v703, %v771
      %v804 = vld [vmem:[#allocation2 + $0x8] sm:$0xff]
      %v805 = vld [vmem:[#allocation2 + $0x10] sm:$0xff]
      %v806 = vld [vmem:[#allocation2 + $0x18] sm:$0xff]
      %v807 = vld [vmem:[#allocation2 + $0x20] sm:$0xff]
      %v808 = vld [vmem:[#allocation2 + $0x28] sm:$0xff]
      %v809 = vld [vmem:[#allocation2 + $0x30] sm:$0xff]
      %v810 = vld [vmem:[#allocation2 + $0x38] sm:$0xff]
      %v811 = vld [vmem:[#allocation2 + $0x40] sm:$0xff]
      %v812 = vld [vmem:[#allocation2 + $0x48] sm:$0xff]
      %v813 = vld [vmem:[#allocation2 + $0x50] sm:$0xff]
      %v814 = vld [vmem:[#allocation2 + $0x58] sm:$0xff]
      %v815 = vld [vmem:[#allocation2 + $0x60] sm:$0xff]
      %v816 = vld [vmem:[#allocation2 + $0x68] sm:$0xff]
      %v817 = vld [vmem:[#allocation2 + $0x70] sm:$0xff]
      %v818 = vld [vmem:[#allocation2 + $0x78] sm:$0xff]
      %v819 = vld [vmem:[#allocation2 + $0x80] sm:$0xff]
      %v820 = vld [vmem:[#allocation2 + $0x88] sm:$0xff]
      %v821 = vld [vmem:[#allocation2 + $0x90] sm:$0xff]
      %v822 = vld [vmem:[#allocation2 + $0x98] sm:$0xff]
      %v823 = vld [vmem:[#allocation2 + $0xa0] sm:$0xff]
      %v824 = vld [vmem:[#allocation2 + $0xa8] sm:$0xff]
      %v825 = vld [vmem:[#allocation2 + $0xb0] sm:$0xff]
      %v826 = vld [vmem:[#allocation2 + $0xb8] sm:$0xff]
      %v827 = vld [vmem:[#allocation2 + $0xc0] sm:$0xff]
      %v828 = vld [vmem:[#allocation2 + $0xc8] sm:$0xff]
      %v829 = vld [vmem:[#allocation2 + $0xd0] sm:$0xff]
      %v830 = vld [vmem:[#allocation2 + $0xd8] sm:$0xff]
      %v831 = vld [vmem:[#allocation2 + $0xe0] sm:$0xff]
      %v832 = vld [vmem:[#allocation2 + $0xe8] sm:$0xff]
      %v833 = vld [vmem:[#allocation2 + $0xf0] sm:$0xff]
      %v834 = vld [vmem:[#allocation2 + $0xf8] sm:$0xff]
      %v835 = vld [vmem:[#allocation2 + $0x100] sm:$0xff]
      %v836 = vlaneseq
      %v837 = vshrl.u32 %v836, 7
      %v838 = vsub.s32 3, %v837
      %v839 = vrot.slane %v535, %v838
      %v840 = vmul.f32 %v804, %v839
      %v841 = vmul.f32 %v805, %v839
      %v842 = vmul.f32 %v806, %v839
      %v843 = vmul.f32 %v807, %v839
      %v844 = vmul.f32 %v808, %v839
      %v845 = vmul.f32 %v809, %v839
      %v846 = vmul.f32 %v810, %v839
      %v847 = vmul.f32 %v811, %v839
      %v848 = vmul.f32 %v812, %v839
      %v849 = vmul.f32 %v813, %v839
      %v850 = vmul.f32 %v814, %v839
      %v851 = vmul.f32 %v815, %v839
      %v852 = vmul.f32 %v816, %v839
      %v853 = vmul.f32 %v817, %v839
      %v854 = vmul.f32 %v818, %v839
      %v855 = vmul.f32 %v819, %v839
      %v856 = vmul.f32 %v820, %v839
      %v857 = vmul.f32 %v821, %v839
      %v858 = vmul.f32 %v822, %v839
      %v859 = vmul.f32 %v823, %v839
      %v860 = vmul.f32 %v824, %v839
      %v861 = vmul.f32 %v825, %v839
      %v862 = vmul.f32 %v826, %v839
      %v863 = vmul.f32 %v827, %v839
      %v864 = vmul.f32 %v828, %v839
      %v865 = vmul.f32 %v829, %v839
      %v866 = vmul.f32 %v830, %v839
      %v867 = vmul.f32 %v831, %v839
      %v868 = vmul.f32 %v832, %v839
      %v869 = vmul.f32 %v833, %v839
      %v870 = vmul.f32 %v834, %v839
      %v871 = vmul.f32 %v835, %v839
      %v872 = vadd.f32 %v772, %v840
      %v873 = vadd.f32 %v773, %v841
      %v874 = vadd.f32 %v774, %v842
      %v875 = vadd.f32 %v775, %v843
      %v876 = vadd.f32 %v776, %v844
      %v877 = vadd.f32 %v777, %v845
      %v878 = vadd.f32 %v778, %v846
      %v879 = vadd.f32 %v779, %v847
      %v880 = vadd.f32 %v780, %v848
      %v881 = vadd.f32 %v781, %v849
      %v882 = vadd.f32 %v782, %v850
      %v883 = vadd.f32 %v783, %v851
      %v884 = vadd.f32 %v784, %v852
      %v885 = vadd.f32 %v785, %v853
      %v886 = vadd.f32 %v786, %v854
      %v887 = vadd.f32 %v787, %v855
      %v888 = vadd.f32 %v788, %v856
      %v889 = vadd.f32 %v789, %v857
      %v890 = vadd.f32 %v790, %v858
      %v891 = vadd.f32 %v791, %v859
      %v892 = vadd.f32 %v792, %v860
      %v893 = vadd.f32 %v793, %v861
      %v894 = vadd.f32 %v794, %v862
      %v895 = vadd.f32 %v795, %v863
      %v896 = vadd.f32 %v796, %v864
      %v897 = vadd.f32 %v797, %v865
      %v898 = vadd.f32 %v798, %v866
      %v899 = vadd.f32 %v799, %v867
      %v900 = vadd.f32 %v800, %v868
      %v901 = vadd.f32 %v801, %v869
      %v902 = vadd.f32 %v802, %v870
      %v903 = vadd.f32 %v803, %v871
      %v904 = vld [vmem:[#allocation2 + $0x9] sm:$0xff]
      %v905 = vld [vmem:[#allocation2 + $0x11] sm:$0xff]
      %v906 = vld [vmem:[#allocation2 + $0x19] sm:$0xff]
      %v907 = vld [vmem:[#allocation2 + $0x21] sm:$0xff]
      %v908 = vld [vmem:[#allocation2 + $0x29] sm:$0xff]
      %v909 = vld [vmem:[#allocation2 + $0x31] sm:$0xff]
      %v910 = vld [vmem:[#allocation2 + $0x39] sm:$0xff]
      %v911 = vld [vmem:[#allocation2 + $0x41] sm:$0xff]
      %v912 = vld [vmem:[#allocation2 + $0x49] sm:$0xff]
      %v913 = vld [vmem:[#allocation2 + $0x51] sm:$0xff]
      %v914 = vld [vmem:[#allocation2 + $0x59] sm:$0xff]
      %v915 = vld [vmem:[#allocation2 + $0x61] sm:$0xff]
      %v916 = vld [vmem:[#allocation2 + $0x69] sm:$0xff]
      %v917 = vld [vmem:[#allocation2 + $0x71] sm:$0xff]
      %v918 = vld [vmem:[#allocation2 + $0x79] sm:$0xff]
      %v919 = vld [vmem:[#allocation2 + $0x81] sm:$0xff]
      %v920 = vld [vmem:[#allocation2 + $0x89] sm:$0xff]
      %v921 = vld [vmem:[#allocation2 + $0x91] sm:$0xff]
      %v922 = vld [vmem:[#allocation2 + $0x99] sm:$0xff]
      %v923 = vld [vmem:[#allocation2 + $0xa1] sm:$0xff]
      %v924 = vld [vmem:[#allocation2 + $0xa9] sm:$0xff]
      %v925 = vld [vmem:[#allocation2 + $0xb1] sm:$0xff]
      %v926 = vld [vmem:[#allocation2 + $0xb9] sm:$0xff]
      %v927 = vld [vmem:[#allocation2 + $0xc1] sm:$0xff]
      %v928 = vld [vmem:[#allocation2 + $0xc9] sm:$0xff]
      %v929 = vld [vmem:[#allocation2 + $0xd1] sm:$0xff]
      %v930 = vld [vmem:[#allocation2 + $0xd9] sm:$0xff]
      %v931 = vld [vmem:[#allocation2 + $0xe1] sm:$0xff]
      %v932 = vld [vmem:[#allocation2 + $0xe9] sm:$0xff]
      %v933 = vld [vmem:[#allocation2 + $0xf1] sm:$0xff]
      %v934 = vld [vmem:[#allocation2 + $0xf9] sm:$0xff]
      %v935 = vld [vmem:[#allocation2 + $0x101] sm:$0xff]
      %v936 = vlaneseq
      %v937 = vshrl.u32 %v936, 7
      %v938 = vsub.s32 4, %v937
      %v939 = vrot.slane %v535, %v938
      %v940 = vmul.f32 %v904, %v939
      %v941 = vmul.f32 %v905, %v939
      %v942 = vmul.f32 %v906, %v939
      %v943 = vmul.f32 %v907, %v939
      %v944 = vmul.f32 %v908, %v939
      %v945 = vmul.f32 %v909, %v939
      %v946 = vmul.f32 %v910, %v939
      %v947 = vmul.f32 %v911, %v939
      %v948 = vmul.f32 %v912, %v939
      %v949 = vmul.f32 %v913, %v939
      %v950 = vmul.f32 %v914, %v939
      %v951 = vmul.f32 %v915, %v939
      %v952 = vmul.f32 %v916, %v939
      %v953 = vmul.f32 %v917, %v939
      %v954 = vmul.f32 %v918, %v939
      %v955 = vmul.f32 %v919, %v939
      %v956 = vmul.f32 %v920, %v939
      %v957 = vmul.f32 %v921, %v939
      %v958 = vmul.f32 %v922, %v939
      %v959 = vmul.f32 %v923, %v939
      %v960 = vmul.f32 %v924, %v939
      %v961 = vmul.f32 %v925, %v939
      %v962 = vmul.f32 %v926, %v939
      %v963 = vmul.f32 %v927, %v939
      %v964 = vmul.f32 %v928, %v939
      %v965 = vmul.f32 %v929, %v939
      %v966 = vmul.f32 %v930, %v939
      %v967 = vmul.f32 %v931, %v939
      %v968 = vmul.f32 %v932, %v939
      %v969 = vmul.f32 %v933, %v939
      %v970 = vmul.f32 %v934, %v939
      %v971 = vmul.f32 %v935, %v939
      %v972 = vadd.f32 %v872, %v940
      %v973 = vadd.f32 %v873, %v941
      %v974 = vadd.f32 %v874, %v942
      %v975 = vadd.f32 %v875, %v943
      %v976 = vadd.f32 %v876, %v944
      %v977 = vadd.f32 %v877, %v945
      %v978 = vadd.f32 %v878, %v946
      %v979 = vadd.f32 %v879, %v947
      %v980 = vadd.f32 %v880, %v948
      %v981 = vadd.f32 %v881, %v949
      %v982 = vadd.f32 %v882, %v950
      %v983 = vadd.f32 %v883, %v951
      %v984 = vadd.f32 %v884, %v952
      %v985 = vadd.f32 %v885, %v953
      %v986 = vadd.f32 %v886, %v954
      %v987 = vadd.f32 %v887, %v955
      %v988 = vadd.f32 %v888, %v956
      %v989 = vadd.f32 %v889, %v957
      %v990 = vadd.f32 %v890, %v958
      %v991 = vadd.f32 %v891, %v959
      %v992 = vadd.f32 %v892, %v960
      %v993 = vadd.f32 %v893, %v961
      %v994 = vadd.f32 %v894, %v962
      %v995 = vadd.f32 %v895, %v963
      %v996 = vadd.f32 %v896, %v964
      %v997 = vadd.f32 %v897, %v965
      %v998 = vadd.f32 %v898, %v966
      %v999 = vadd.f32 %v899, %v967
      %v1000 = vadd.f32 %v900, %v968
      %v1001 = vadd.f32 %v901, %v969
      %v1002 = vadd.f32 %v902, %v970
      %v1003 = vadd.f32 %v903, %v971
      %v1004 = vld [vmem:[#allocation2 + $0xa] sm:$0xff]
      %v1005 = vld [vmem:[#allocation2 + $0x12] sm:$0xff]
      %v1006 = vld [vmem:[#allocation2 + $0x1a] sm:$0xff]
      %v1007 = vld [vmem:[#allocation2 + $0x22] sm:$0xff]
      %v1008 = vld [vmem:[#allocation2 + $0x2a] sm:$0xff]
      %v1009 = vld [vmem:[#allocation2 + $0x32] sm:$0xff]
      %v1010 = vld [vmem:[#allocation2 + $0x3a] sm:$0xff]
      %v1011 = vld [vmem:[#allocation2 + $0x42] sm:$0xff]
      %v1012 = vld [vmem:[#allocation2 + $0x4a] sm:$0xff]
      %v1013 = vld [vmem:[#allocation2 + $0x52] sm:$0xff]
      %v1014 = vld [vmem:[#allocation2 + $0x5a] sm:$0xff]
      %v1015 = vld [vmem:[#allocation2 + $0x62] sm:$0xff]
      %v1016 = vld [vmem:[#allocation2 + $0x6a] sm:$0xff]
      %v1017 = vld [vmem:[#allocation2 + $0x72] sm:$0xff]
      %v1018 = vld [vmem:[#allocation2 + $0x7a] sm:$0xff]
      %v1019 = vld [vmem:[#allocation2 + $0x82] sm:$0xff]
      %v1020 = vld [vmem:[#allocation2 + $0x8a] sm:$0xff]
      %v1021 = vld [vmem:[#allocation2 + $0x92] sm:$0xff]
      %v1022 = vld [vmem:[#allocation2 + $0x9a] sm:$0xff]
      %v1023 = vld [vmem:[#allocation2 + $0xa2] sm:$0xff]
      %v1024 = vld [vmem:[#allocation2 + $0xaa] sm:$0xff]
      %v1025 = vld [vmem:[#allocation2 + $0xb2] sm:$0xff]
      %v1026 = vld [vmem:[#allocation2 + $0xba] sm:$0xff]
      %v1027 = vld [vmem:[#allocation2 + $0xc2] sm:$0xff]
      %v1028 = vld [vmem:[#allocation2 + $0xca] sm:$0xff]
      %v1029 = vld [vmem:[#allocation2 + $0xd2] sm:$0xff]
      %v1030 = vld [vmem:[#allocation2 + $0xda] sm:$0xff]
      %v1031 = vld [vmem:[#allocation2 + $0xe2] sm:$0xff]
      %v1032 = vld [vmem:[#allocation2 + $0xea] sm:$0xff]
      %v1033 = vld [vmem:[#allocation2 + $0xf2] sm:$0xff]
      %v1034 = vld [vmem:[#allocation2 + $0xfa] sm:$0xff]
      %v1035 = vld [vmem:[#allocation2 + $0x102] sm:$0xff]
      %v1036 = vlaneseq
      %v1037 = vshrl.u32 %v1036, 7
      %v1038 = vsub.s32 5, %v1037
      %v1039 = vrot.slane %v535, %v1038
      %v1040 = vmul.f32 %v1004, %v1039
      %v1041 = vmul.f32 %v1005, %v1039
      %v1042 = vmul.f32 %v1006, %v1039
      %v1043 = vmul.f32 %v1007, %v1039
      %v1044 = vmul.f32 %v1008, %v1039
      %v1045 = vmul.f32 %v1009, %v1039
      %v1046 = vmul.f32 %v1010, %v1039
      %v1047 = vmul.f32 %v1011, %v1039
      %v1048 = vmul.f32 %v1012, %v1039
      %v1049 = vmul.f32 %v1013, %v1039
      %v1050 = vmul.f32 %v1014, %v1039
      %v1051 = vmul.f32 %v1015, %v1039
      %v1052 = vmul.f32 %v1016, %v1039
      %v1053 = vmul.f32 %v1017, %v1039
      %v1054 = vmul.f32 %v1018, %v1039
      %v1055 = vmul.f32 %v1019, %v1039
      %v1056 = vmul.f32 %v1020, %v1039
      %v1057 = vmul.f32 %v1021, %v1039
      %v1058 = vmul.f32 %v1022, %v1039
      %v1059 = vmul.f32 %v1023, %v1039
      %v1060 = vmul.f32 %v1024, %v1039
      %v1061 = vmul.f32 %v1025, %v1039
      %v1062 = vmul.f32 %v1026, %v1039
      %v1063 = vmul.f32 %v1027, %v1039
      %v1064 = vmul.f32 %v1028, %v1039
      %v1065 = vmul.f32 %v1029, %v1039
      %v1066 = vmul.f32 %v1030, %v1039
      %v1067 = vmul.f32 %v1031, %v1039
      %v1068 = vmul.f32 %v1032, %v1039
      %v1069 = vmul.f32 %v1033, %v1039
      %v1070 = vmul.f32 %v1034, %v1039
      %v1071 = vmul.f32 %v1035, %v1039
      %v1072 = vadd.f32 %v972, %v1040
      %v1073 = vadd.f32 %v973, %v1041
      %v1074 = vadd.f32 %v974, %v1042
      %v1075 = vadd.f32 %v975, %v1043
      %v1076 = vadd.f32 %v976, %v1044
      %v1077 = vadd.f32 %v977, %v1045
      %v1078 = vadd.f32 %v978, %v1046
      %v1079 = vadd.f32 %v979, %v1047
      %v1080 = vadd.f32 %v980, %v1048
      %v1081 = vadd.f32 %v981, %v1049
      %v1082 = vadd.f32 %v982, %v1050
      %v1083 = vadd.f32 %v983, %v1051
      %v1084 = vadd.f32 %v984, %v1052
      %v1085 = vadd.f32 %v985, %v1053
      %v1086 = vadd.f32 %v986, %v1054
      %v1087 = vadd.f32 %v987, %v1055
      %v1088 = vadd.f32 %v988, %v1056
      %v1089 = vadd.f32 %v989, %v1057
      %v1090 = vadd.f32 %v990, %v1058
      %v1091 = vadd.f32 %v991, %v1059
      %v1092 = vadd.f32 %v992, %v1060
      %v1093 = vadd.f32 %v993, %v1061
      %v1094 = vadd.f32 %v994, %v1062
      %v1095 = vadd.f32 %v995, %v1063
      %v1096 = vadd.f32 %v996, %v1064
      %v1097 = vadd.f32 %v997, %v1065
      %v1098 = vadd.f32 %v998, %v1066
      %v1099 = vadd.f32 %v999, %v1067
      %v1100 = vadd.f32 %v1000, %v1068
      %v1101 = vadd.f32 %v1001, %v1069
      %v1102 = vadd.f32 %v1002, %v1070
      %v1103 = vadd.f32 %v1003, %v1071
      %v1104 = vld [vmem:[#allocation2 + $0xb] sm:$0xff]
      %v1105 = vld [vmem:[#allocation2 + $0x13] sm:$0xff]
      %v1106 = vld [vmem:[#allocation2 + $0x1b] sm:$0xff]
      %v1107 = vld [vmem:[#allocation2 + $0x23] sm:$0xff]
      %v1108 = vld [vmem:[#allocation2 + $0x2b] sm:$0xff]
      %v1109 = vld [vmem:[#allocation2 + $0x33] sm:$0xff]
      %v1110 = vld [vmem:[#allocation2 + $0x3b] sm:$0xff]
      %v1111 = vld [vmem:[#allocation2 + $0x43] sm:$0xff]
      %v1112 = vld [vmem:[#allocation2 + $0x4b] sm:$0xff]
      %v1113 = vld [vmem:[#allocation2 + $0x53] sm:$0xff]
      %v1114 = vld [vmem:[#allocation2 + $0x5b] sm:$0xff]
      %v1115 = vld [vmem:[#allocation2 + $0x63] sm:$0xff]
      %v1116 = vld [vmem:[#allocation2 + $0x6b] sm:$0xff]
      %v1117 = vld [vmem:[#allocation2 + $0x73] sm:$0xff]
      %v1118 = vld [vmem:[#allocation2 + $0x7b] sm:$0xff]
      %v1119 = vld [vmem:[#allocation2 + $0x83] sm:$0xff]
      %v1120 = vld [vmem:[#allocation2 + $0x8b] sm:$0xff]
      %v1121 = vld [vmem:[#allocation2 + $0x93] sm:$0xff]
      %v1122 = vld [vmem:[#allocation2 + $0x9b] sm:$0xff]
      %v1123 = vld [vmem:[#allocation2 + $0xa3] sm:$0xff]
      %v1124 = vld [vmem:[#allocation2 + $0xab] sm:$0xff]
      %v1125 = vld [vmem:[#allocation2 + $0xb3] sm:$0xff]
      %v1126 = vld [vmem:[#allocation2 + $0xbb] sm:$0xff]
      %v1127 = vld [vmem:[#allocation2 + $0xc3] sm:$0xff]
      %v1128 = vld [vmem:[#allocation2 + $0xcb] sm:$0xff]
      %v1129 = vld [vmem:[#allocation2 + $0xd3] sm:$0xff]
      %v1130 = vld [vmem:[#allocation2 + $0xdb] sm:$0xff]
      %v1131 = vld [vmem:[#allocation2 + $0xe3] sm:$0xff]
      %v1132 = vld [vmem:[#allocation2 + $0xeb] sm:$0xff]
      %v1133 = vld [vmem:[#allocation2 + $0xf3] sm:$0xff]
      %v1134 = vld [vmem:[#allocation2 + $0xfb] sm:$0xff]
      %v1135 = vld [vmem:[#allocation2 + $0x103] sm:$0xff]
      %v1136 = vlaneseq
      %v1137 = vshrl.u32 %v1136, 7
      %v1138 = vsub.s32 6, %v1137
      %v1139 = vrot.slane %v535, %v1138
      %v1140 = vmul.f32 %v1104, %v1139
      %v1141 = vmul.f32 %v1105, %v1139
      %v1142 = vmul.f32 %v1106, %v1139
      %v1143 = vmul.f32 %v1107, %v1139
      %v1144 = vmul.f32 %v1108, %v1139
      %v1145 = vmul.f32 %v1109, %v1139
      %v1146 = vmul.f32 %v1110, %v1139
      %v1147 = vmul.f32 %v1111, %v1139
      %v1148 = vmul.f32 %v1112, %v1139
      %v1149 = vmul.f32 %v1113, %v1139
      %v1150 = vmul.f32 %v1114, %v1139
      %v1151 = vmul.f32 %v1115, %v1139
      %v1152 = vmul.f32 %v1116, %v1139
      %v1153 = vmul.f32 %v1117, %v1139
      %v1154 = vmul.f32 %v1118, %v1139
      %v1155 = vmul.f32 %v1119, %v1139
      %v1156 = vmul.f32 %v1120, %v1139
      %v1157 = vmul.f32 %v1121, %v1139
      %v1158 = vmul.f32 %v1122, %v1139
      %v1159 = vmul.f32 %v1123, %v1139
      %v1160 = vmul.f32 %v1124, %v1139
      %v1161 = vmul.f32 %v1125, %v1139
      %v1162 = vmul.f32 %v1126, %v1139
      %v1163 = vmul.f32 %v1127, %v1139
      %v1164 = vmul.f32 %v1128, %v1139
      %v1165 = vmul.f32 %v1129, %v1139
      %v1166 = vmul.f32 %v1130, %v1139
      %v1167 = vmul.f32 %v1131, %v1139
      %v1168 = vmul.f32 %v1132, %v1139
      %v1169 = vmul.f32 %v1133, %v1139
      %v1170 = vmul.f32 %v1134, %v1139
      %v1171 = vmul.f32 %v1135, %v1139
      %v1172 = vadd.f32 %v1072, %v1140
      %v1173 = vadd.f32 %v1073, %v1141
      %v1174 = vadd.f32 %v1074, %v1142
      %v1175 = vadd.f32 %v1075, %v1143
      %v1176 = vadd.f32 %v1076, %v1144
      %v1177 = vadd.f32 %v1077, %v1145
      %v1178 = vadd.f32 %v1078, %v1146
      %v1179 = vadd.f32 %v1079, %v1147
      %v1180 = vadd.f32 %v1080, %v1148
      %v1181 = vadd.f32 %v1081, %v1149
      %v1182 = vadd.f32 %v1082, %v1150
      %v1183 = vadd.f32 %v1083, %v1151
      %v1184 = vadd.f32 %v1084, %v1152
      %v1185 = vadd.f32 %v1085, %v1153
      %v1186 = vadd.f32 %v1086, %v1154
      %v1187 = vadd.f32 %v1087, %v1155
      %v1188 = vadd.f32 %v1088, %v1156
      %v1189 = vadd.f32 %v1089, %v1157
      %v1190 = vadd.f32 %v1090, %v1158
      %v1191 = vadd.f32 %v1091, %v1159
      %v1192 = vadd.f32 %v1092, %v1160
      %v1193 = vadd.f32 %v1093, %v1161
      %v1194 = vadd.f32 %v1094, %v1162
      %v1195 = vadd.f32 %v1095, %v1163
      %v1196 = vadd.f32 %v1096, %v1164
      %v1197 = vadd.f32 %v1097, %v1165
      %v1198 = vadd.f32 %v1098, %v1166
      %v1199 = vadd.f32 %v1099, %v1167
      %v1200 = vadd.f32 %v1100, %v1168
      %v1201 = vadd.f32 %v1101, %v1169
      %v1202 = vadd.f32 %v1102, %v1170
      %v1203 = vadd.f32 %v1103, %v1171
      %v1204 = vld [vmem:[%s447] sm:$0x1]
      %v1206 = vlaneseq
      %v1207 = vshrl.u32 %v1206, 7
      %v1208 = vsub.s32 0, %v1207
      %v1209 = vrot.slane %v1204, %v1208
      %v1211 = vadd.f32 %v1172, %v1209
      %v1212 = vadd.f32 %v1173, %v1209
      %v1213 = vadd.f32 %v1174, %v1209
      %v1214 = vadd.f32 %v1175, %v1209
      %v1215 = vadd.f32 %v1176, %v1209
      %v1216 = vadd.f32 %v1177, %v1209
      %v1217 = vadd.f32 %v1178, %v1209
      %v1218 = vadd.f32 %v1179, %v1209
      %v1219 = vadd.f32 %v1180, %v1209
      %v1220 = vadd.f32 %v1181, %v1209
      %v1221 = vadd.f32 %v1182, %v1209
      %v1222 = vadd.f32 %v1183, %v1209
      %v1223 = vadd.f32 %v1184, %v1209
      %v1224 = vadd.f32 %v1185, %v1209
      %v1225 = vadd.f32 %v1186, %v1209
      %v1226 = vadd.f32 %v1187, %v1209
      %v1227 = vadd.f32 %v1188, %v1209
      %v1228 = vadd.f32 %v1189, %v1209
      %v1229 = vadd.f32 %v1190, %v1209
      %v1230 = vadd.f32 %v1191, %v1209
      %v1231 = vadd.f32 %v1192, %v1209
      %v1232 = vadd.f32 %v1193, %v1209
      %v1233 = vadd.f32 %v1194, %v1209
      %v1234 = vadd.f32 %v1195, %v1209
      %v1235 = vadd.f32 %v1196, %v1209
      %v1236 = vadd.f32 %v1197, %v1209
      %v1237 = vadd.f32 %v1198, %v1209
      %v1238 = vadd.f32 %v1199, %v1209
      %v1239 = vadd.f32 %v1200, %v1209
      %v1240 = vadd.f32 %v1201, %v1209
      %v1241 = vadd.f32 %v1202, %v1209
      %v1242 = vadd.f32 %v1203, %v1209
      %v1243 = vsub.f32 0.0, %v1211
      %v1244 = vsub.f32 0.0, %v1212
      %v1245 = vsub.f32 0.0, %v1213
      %v1246 = vsub.f32 0.0, %v1214
      %v1247 = vsub.f32 0.0, %v1215
      %v1248 = vsub.f32 0.0, %v1216
      %v1249 = vsub.f32 0.0, %v1217
      %v1250 = vsub.f32 0.0, %v1218
      %v1251 = vsub.f32 0.0, %v1219
      %v1252 = vsub.f32 0.0, %v1220
      %v1253 = vsub.f32 0.0, %v1221
      %v1254 = vsub.f32 0.0, %v1222
      %v1255 = vsub.f32 0.0, %v1223
      %v1256 = vsub.f32 0.0, %v1224
      %v1257 = vsub.f32 0.0, %v1225
      %v1258 = vsub.f32 0.0, %v1226
      %v1259 = vsub.f32 0.0, %v1227
      %v1260 = vsub.f32 0.0, %v1228
      %v1261 = vsub.f32 0.0, %v1229
      %v1262 = vsub.f32 0.0, %v1230
      %v1263 = vsub.f32 0.0, %v1231
      %v1264 = vsub.f32 0.0, %v1232
      %v1265 = vsub.f32 0.0, %v1233
      %v1266 = vsub.f32 0.0, %v1234
      %v1267 = vsub.f32 0.0, %v1235
      %v1268 = vsub.f32 0.0, %v1236
      %v1269 = vsub.f32 0.0, %v1237
      %v1270 = vsub.f32 0.0, %v1238
      %v1271 = vsub.f32 0.0, %v1239
      %v1272 = vsub.f32 0.0, %v1240
      %v1273 = vsub.f32 0.0, %v1241
      %v1274 = vsub.f32 0.0, %v1242
      %v1275 = vmul.f32 %v1243, 1.442695
      %v1276 = vpow.pop %v1275
      %v1277 = vmul.f32 %v1244, 1.442695
      %v1278 = vpow.pop %v1277
      %v1279 = vmul.f32 %v1245, 1.442695
      %v1280 = vpow.pop %v1279
      %v1281 = vmul.f32 %v1246, 1.442695
      %v1282 = vpow.pop %v1281
      %v1283 = vmul.f32 %v1247, 1.442695
      %v1284 = vpow.pop %v1283
      %v1285 = vmul.f32 %v1248, 1.442695
      %v1286 = vpow.pop %v1285
      %v1287 = vmul.f32 %v1249, 1.442695
      %v1288 = vpow.pop %v1287
      %v1289 = vmul.f32 %v1250, 1.442695
      %v1290 = vpow.pop %v1289
      %v1291 = vmul.f32 %v1251, 1.442695
      %v1292 = vpow.pop %v1291
      %v1293 = vmul.f32 %v1252, 1.442695
      %v1294 = vpow.pop %v1293
      %v1295 = vmul.f32 %v1253, 1.442695
      %v1296 = vpow.pop %v1295
      %v1297 = vmul.f32 %v1254, 1.442695
      %v1298 = vpow.pop %v1297
      %v1299 = vmul.f32 %v1255, 1.442695
      %v1300 = vpow.pop %v1299
      %v1301 = vmul.f32 %v1256, 1.442695
      %v1302 = vpow.pop %v1301
      %v1303 = vmul.f32 %v1257, 1.442695
      %v1304 = vpow.pop %v1303
      %v1305 = vmul.f32 %v1258, 1.442695
      %v1306 = vpow.pop %v1305
      %v1307 = vmul.f32 %v1259, 1.442695
      %v1308 = vpow.pop %v1307
      %v1309 = vmul.f32 %v1260, 1.442695
      %v1310 = vpow.pop %v1309
      %v1311 = vmul.f32 %v1261, 1.442695
      %v1312 = vpow.pop %v1311
      %v1313 = vmul.f32 %v1262, 1.442695
      %v1314 = vpow.pop %v1313
      %v1315 = vmul.f32 %v1263, 1.442695
      %v1316 = vpow.pop %v1315
      %v1317 = vmul.f32 %v1264, 1.442695
      %v1318 = vpow.pop %v1317
      %v1319 = vmul.f32 %v1265, 1.442695
      %v1320 = vpow.pop %v1319
      %v1321 = vmul.f32 %v1266, 1.442695
      %v1322 = vpow.pop %v1321
      %v1323 = vmul.f32 %v1267, 1.442695
      %v1324 = vpow.pop %v1323
      %v1325 = vmul.f32 %v1268, 1.442695
      %v1326 = vpow.pop %v1325
      %v1327 = vmul.f32 %v1269, 1.442695
      %v1328 = vpow.pop %v1327
      %v1329 = vmul.f32 %v1270, 1.442695
      %v1330 = vpow.pop %v1329
      %v1331 = vmul.f32 %v1271, 1.442695
      %v1332 = vpow.pop %v1331
      %v1333 = vmul.f32 %v1272, 1.442695
      %v1334 = vpow.pop %v1333
      %v1335 = vmul.f32 %v1273, 1.442695
      %v1336 = vpow.pop %v1335
      %v1337 = vmul.f32 %v1274, 1.442695
      %v1338 = vpow.pop %v1337
      %v1339 = vadd.f32 %v1276, 1.0
      %v1340 = vadd.f32 %v1278, 1.0
      %v1341 = vadd.f32 %v1280, 1.0
      %v1342 = vadd.f32 %v1282, 1.0
      %v1343 = vadd.f32 %v1284, 1.0
      %v1344 = vadd.f32 %v1286, 1.0
      %v1345 = vadd.f32 %v1288, 1.0
      %v1346 = vadd.f32 %v1290, 1.0
      %v1347 = vadd.f32 %v1292, 1.0
      %v1348 = vadd.f32 %v1294, 1.0
      %v1349 = vadd.f32 %v1296, 1.0
      %v1350 = vadd.f32 %v1298, 1.0
      %v1351 = vadd.f32 %v1300, 1.0
      %v1352 = vadd.f32 %v1302, 1.0
      %v1353 = vadd.f32 %v1304, 1.0
      %v1354 = vadd.f32 %v1306, 1.0
      %v1355 = vadd.f32 %v1308, 1.0
      %v1356 = vadd.f32 %v1310, 1.0
      %v1357 = vadd.f32 %v1312, 1.0
      %v1358 = vadd.f32 %v1314, 1.0
      %v1359 = vadd.f32 %v1316, 1.0
      %v1360 = vadd.f32 %v1318, 1.0
      %v1361 = vadd.f32 %v1320, 1.0
      %v1362 = vadd.f32 %v1322, 1.0
      %v1363 = vadd.f32 %v1324, 1.0
      %v1364 = vadd.f32 %v1326, 1.0
      %v1365 = vadd.f32 %v1328, 1.0
      %v1366 = vadd.f32 %v1330, 1.0
      %v1367 = vadd.f32 %v1332, 1.0
      %v1368 = vadd.f32 %v1334, 1.0
      %v1369 = vadd.f32 %v1336, 1.0
      %v1370 = vadd.f32 %v1338, 1.0
      %v1371 = vrcp.pop %v1339
      %v1372 = vrcp.pop %v1340
      %v1373 = vrcp.pop %v1341
      %v1374 = vrcp.pop %v1342
      %v1375 = vrcp.pop %v1343
      %v1376 = vrcp.pop %v1344
      %v1377 = vrcp.pop %v1345
      %v1378 = vrcp.pop %v1346
      %v1379 = vrcp.pop %v1347
      %v1380 = vrcp.pop %v1348
      %v1381 = vrcp.pop %v1349
      %v1382 = vrcp.pop %v1350
      %v1383 = vrcp.pop %v1351
      %v1384 = vrcp.pop %v1352
      %v1385 = vrcp.pop %v1353
      %v1386 = vrcp.pop %v1354
      %v1387 = vrcp.pop %v1355
      %v1388 = vrcp.pop %v1356
      %v1389 = vrcp.pop %v1357
      %v1390 = vrcp.pop %v1358
      %v1391 = vrcp.pop %v1359
      %v1392 = vrcp.pop %v1360
      %v1393 = vrcp.pop %v1361
      %v1394 = vrcp.pop %v1362
      %v1395 = vrcp.pop %v1363
      %v1396 = vrcp.pop %v1364
      %v1397 = vrcp.pop %v1365
      %v1398 = vrcp.pop %v1366
      %v1399 = vrcp.pop %v1367
      %v1400 = vrcp.pop %v1368
      %v1401 = vrcp.pop %v1369
      %v1402 = vrcp.pop %v1370
      %v1403 = vmul.f32 %v1211, %v1371
      %v1404 = vmul.f32 %v1212, %v1372
      %v1405 = vmul.f32 %v1213, %v1373
      %v1406 = vmul.f32 %v1214, %v1374
      %v1407 = vmul.f32 %v1215, %v1375
      %v1408 = vmul.f32 %v1216, %v1376
      %v1409 = vmul.f32 %v1217, %v1377
      %v1410 = vmul.f32 %v1218, %v1378
      %v1411 = vmul.f32 %v1219, %v1379
      %v1412 = vmul.f32 %v1220, %v1380
      %v1413 = vmul.f32 %v1221, %v1381
      %v1414 = vmul.f32 %v1222, %v1382
      %v1415 = vmul.f32 %v1223, %v1383
      %v1416 = vmul.f32 %v1224, %v1384
      %v1417 = vmul.f32 %v1225, %v1385
      %v1418 = vmul.f32 %v1226, %v1386
      %v1419 = vmul.f32 %v1227, %v1387
      %v1420 = vmul.f32 %v1228, %v1388
      %v1421 = vmul.f32 %v1229, %v1389
      %v1422 = vmul.f32 %v1230, %v1390
      %v1423 = vmul.f32 %v1231, %v1391
      %v1424 = vmul.f32 %v1232, %v1392
      %v1425 = vmul.f32 %v1233, %v1393
      %v1426 = vmul.f32 %v1234, %v1394
      %v1427 = vmul.f32 %v1235, %v1395
      %v1428 = vmul.f32 %v1236, %v1396
      %v1429 = vmul.f32 %v1237, %v1397
      %v1430 = vmul.f32 %v1238, %v1398
      %v1431 = vmul.f32 %v1239, %v1399
      %v1432 = vmul.f32 %v1240, %v1400
      %v1433 = vmul.f32 %v1241, %v1401
      %v1434 = vmul.f32 %v1242, %v1402
      %1435 = vst.msk [vmem:[%s459] sm:$0xff] %vm466, %v1403
      %1436 = vst.msk [vmem:[%s459 + $0x8] sm:$0xff] %vm466, %v1404
      %1437 = vst.msk [vmem:[%s459 + $0x10] sm:$0xff] %vm466, %v1405
      %1438 = vst.msk [vmem:[%s459 + $0x18] sm:$0xff] %vm466, %v1406
      %1439 = vst.msk [vmem:[%s459 + $0x20] sm:$0xff] %vm466, %v1407
      %1440 = vst.msk [vmem:[%s459 + $0x28] sm:$0xff] %vm466, %v1408
      %1441 = vst.msk [vmem:[%s459 + $0x30] sm:$0xff] %vm466, %v1409
      %1442 = vst.msk [vmem:[%s459 + $0x38] sm:$0xff] %vm466, %v1410
      %1443 = vst.msk [vmem:[%s459 + $0x40] sm:$0xff] %vm466, %v1411
      %1444 = vst.msk [vmem:[%s459 + $0x48] sm:$0xff] %vm466, %v1412
      %1445 = vst.msk [vmem:[%s459 + $0x50] sm:$0xff] %vm466, %v1413
      %1446 = vst.msk [vmem:[%s459 + $0x58] sm:$0xff] %vm466, %v1414
      %1447 = vst.msk [vmem:[%s459 + $0x60] sm:$0xff] %vm466, %v1415
      %1448 = vst.msk [vmem:[%s459 + $0x68] sm:$0xff] %vm466, %v1416
      %1449 = vst.msk [vmem:[%s459 + $0x70] sm:$0xff] %vm466, %v1417
      %1450 = vst.msk [vmem:[%s459 + $0x78] sm:$0xff] %vm466, %v1418
      %1451 = vst.msk [vmem:[%s459 + $0x80] sm:$0xff] %vm466, %v1419
      %1452 = vst.msk [vmem:[%s459 + $0x88] sm:$0xff] %vm466, %v1420
      %1453 = vst.msk [vmem:[%s459 + $0x90] sm:$0xff] %vm466, %v1421
      %1454 = vst.msk [vmem:[%s459 + $0x98] sm:$0xff] %vm466, %v1422
      %1455 = vst.msk [vmem:[%s459 + $0xa0] sm:$0xff] %vm466, %v1423
      %1456 = vst.msk [vmem:[%s459 + $0xa8] sm:$0xff] %vm466, %v1424
      %1457 = vst.msk [vmem:[%s459 + $0xb0] sm:$0xff] %vm466, %v1425
      %1458 = vst.msk [vmem:[%s459 + $0xb8] sm:$0xff] %vm466, %v1426
      %1459 = vst.msk [vmem:[%s459 + $0xc0] sm:$0xff] %vm466, %v1427
      %1460 = vst.msk [vmem:[%s459 + $0xc8] sm:$0xff] %vm466, %v1428
      %1461 = vst.msk [vmem:[%s459 + $0xd0] sm:$0xff] %vm466, %v1429
      %1462 = vst.msk [vmem:[%s459 + $0xd8] sm:$0xff] %vm466, %v1430
      %1463 = vst.msk [vmem:[%s459 + $0xe0] sm:$0xff] %vm466, %v1431
      %1464 = vst.msk [vmem:[%s459 + $0xe8] sm:$0xff] %vm466, %v1432
      %1465 = vst.msk [vmem:[%s459 + $0xf0] sm:$0xff] %vm466, %v1433
      %1466 = vst.msk [vmem:[%s459 + $0xf8] sm:$0xff] %vm466, %v1434
      %s1467 = smul.u32 32, %s23
      %p1468 = scmp.lt.s32.totalorder %s21, 1
      %s1469 = scalar_select %p1468, %s21, 1
      %p1470 = scmp.lt.s32.totalorder %s1467, 31
      %s1471 = scalar_select %p1470, %s1467, 31
      %p1472 = scmp.lt.s32.totalorder %s22, 0
      %s1473 = scalar_select %p1472, %s22, 0
      %s1474 = sadd.s32 %s1473, %s1471
      %s1475 = smul.addr %s1469, 32
      %s1476 = sadd.s32 %s1474, %s1475
      %s1477 = smul.addr %s1476, 8
      %s1478 = scalar_lea.vmem %s5, %s1477
      // Predicated region
      $region41: #{tpu_custom_call.1} parent=39 // pred_check
        %p1479 = pneg %p215
      $region42: #{tpu_custom_call.1} parent=39 // pred_check_branch
        %1481 = sbr.rel (%p1479) target = $region44
      $region43: #{tpu_custom_call.1} parent=39 // pred_region
        %s1482 = smul.u32 32, %s23
      $region44: #{tpu_custom_call.1} parent=39 // pred_fallthru
        _
    $region40: #{tpu_custom_call.1} parent=5 // pred_fallthru
      _
    %p1483 = scmp.le.s32.totalorder 2, %s11
    // Predicated region
    $region45: #{tpu_custom_call.1} parent=5 // pred_check
      %p1484 = pneg %p1483
    $region46: #{tpu_custom_call.1} parent=5 // pred_check_branch
      %1486 = sbr.rel (%p1484) target = $region48
    $region47: #{tpu_custom_call.1} parent=5 // pred_region
      %s1487 = ssub.s32 %s11, 2
      // Predicated region
      $region49: #{tpu_custom_call.1} parent=47 // pred_check
        %p1488 = pneg %p221
      $region50: #{tpu_custom_call.1} parent=47 // pred_check_branch
        %1490 = sbr.rel (%p1488) target = $region52
      $region51: #{tpu_custom_call.1} parent=47 // pred_region
        %s1491 = smul.u32 32, %s26
        %p1492 = scmp.lt.s32.totalorder %s24, 1
        %s1493 = scalar_select %p1492, %s24, 1
        %p1494 = scmp.lt.s32.totalorder %s1491, 31
        %s1495 = scalar_select %p1494, %s1491, 31
        %p1496 = scmp.lt.s32.totalorder %s25, 0
        %s1497 = scalar_select %p1496, %s25, 0
        %s1498 = sadd.s32 %s1497, %s1495
        %s1499 = smul.addr %s1493, 32
        %s1500 = sadd.s32 %s1498, %s1499
        %s1501 = smul.addr %s1500, 8
        %s1502 = scalar_lea.vmem %s5, %s1501
      $region52: #{tpu_custom_call.1} parent=47 // pred_fallthru
        _
    $region48: #{tpu_custom_call.1} parent=5 // pred_fallthru
      _
  $region6: #{tpu_custom_call.1} parent=0 // loop_footer
    %s15 = sadd.s32 1, %s11
  $region7: #{tpu_custom_call.1} parent=0 // loop_footer_branch
    %10 = sbr.rel target = $region3
  $region8: #{tpu_custom_call.1} parent=0 // loop_exit
    _

</llo_original>
